<compile_context>
chip_gen: v7x
topology: tpu7x:2x2x1
jax: 0.10.0
libtpu: 0.0.40
codegen_flags: <defaults>
</compile_context>

<pallas_src>
import functools

import jax
import jax.numpy as jnp
from jax.experimental import pallas as pl
from jax.experimental.pallas import tpu as pltpu


# Lane-dense grouping factors: G consecutive conv-output pixels x Cout channels
# are packed into one output row of width G*Cout (a multiple of 128).
G1 = 8            # conv1: 8 * 16 = 128 output lanes
G2 = 4            # conv2: 4 * 32 = 128 output lanes
FC_PAD = 128      # fc1 (100) and fc2 (10) outputs padded to 128 lanes
N_FC1 = 100
N_CLASSES = 10

TD_CONV = 512                          # lane-dense rows per conv grid step
TB_FC = 256                            # batch rows per FC-head grid step
SUBLANE = 16                           # safe sublane multiple for bf16/f32 blocks
VMEM_LIMIT_BYTES = 32 * 1024 * 1024    # safe on v5e/v6e (128 MiB) and v7x (64 MiB)


def _mosaic_params():
    return pltpu.CompilerParams(
        dimension_semantics=("parallel",),
        vmem_limit_bytes=VMEM_LIMIT_BYTES,
    )


def _round_up(x, m):
    return ((x + m - 1) // m) * m


def _pick_row_tile(m, max_tile):
    """Row-block size: a multiple of SUBLANE (legal bf16/f32 sublane tiling),
    capped at max_tile, and giving a grid of >= 2 steps whenever the row count
    allows it so ("parallel",) can use both v7x TensorCores."""
    if m <= SUBLANE:
        return m                                   # single full-dim block
    return min(max_tile, _round_up(pl.cdiv(m, 2), SUBLANE))


# ----------------------------- Pallas kernels ------------------------------

def _conv_matmul_kernel(x_ref, w_ref, b_ref, o_ref, *, input_relu):
    """o = (relu?(x) @ w) + b.  x is the lane-dense grouped bf16 patch matrix,
    w the block-diagonal grouped bf16 weight -> unmasked loads/stores, f32 acc,
    bf16 store for the inter-layer chain."""
    x = x_ref[...]
    if input_relu:
        x = jnp.maximum(x, 0)            # consumer-side ReLU (no extra HBM pass)
    y = jnp.dot(x, w_ref[...], preferred_element_type=jnp.float32) + b_ref[...]
    o_ref[...] = y.astype(o_ref.dtype)


def _fc_head_kernel(x_ref, w1_ref, b1_ref, w2_ref, b2_ref,
                    fc1_ref, logit_ref, prob_ref, *, n_classes):
    """Fused tail: relu(conv2 pre-act) -> fc1 -> relu -> fc2 -> masked softmax.
    All weight/bias/output lane widths are padded to 128 (unmasked stores)."""
    x = jnp.maximum(x_ref[...], 0)                       # relu of conv2 pre-act
    h = jnp.dot(x, w1_ref[...], preferred_element_type=jnp.float32) + b1_ref[...]
    fc1_ref[...] = h                                     # fc1 pre-act (padded cols = 0)
    hr = jnp.maximum(h, 0.0).astype(w2_ref.dtype)
    logits = jnp.dot(hr, w2_ref[...], preferred_element_type=jnp.float32) + b2_ref[...]
    logit_ref[...] = logits                              # padded cols are exactly 0
    lane = jax.lax.broadcasted_iota(jnp.int32, logits.shape, 1)
    valid = lane < n_classes
    lm = jnp.where(valid, logits, jnp.full_like(logits, -1e30))
    m = jnp.max(lm, axis=-1, keepdims=True)
    e = jnp.where(valid, jnp.exp(lm - m), jnp.zeros_like(logits))
    prob_ref[...] = e / jnp.sum(e, axis=-1, keepdims=True)


# ----------------------------- conv via im2col + grouped Pallas matmul ------

def _im2col(x_nhwc, kh, kw, stride, pad):
    """x: (B,H,W,C) -> patches (B, oh, ow, kh*kw*C) in (i, j, c) feature order."""
    x = jnp.pad(x_nhwc, ((0, 0), (pad, pad), (pad, pad), (0, 0)))
    B, Hp, Wp, C = x.shape
    oh = (Hp - kh) // stride + 1
    ow = (Wp - kw) // stride + 1
    pieces = []
    for i in range(kh):
        for j in range(kw):
            pieces.append(
                x[:, i: i + oh * stride: stride, j: j + ow * stride: stride, :]
            )
    p = jnp.stack(pieces, axis=3)                 # (B, oh, ow, kh*kw, C)
    return p.reshape(B, oh, ow, kh * kw * C), oh, ow


def conv2d_grouped(x_nhwc, w_g, b_g, *, group, kh, kw, stride, pad, input_relu):
    """Conv pre-activation via XLA im2col + lane-dense grouped Pallas matmul.
    Returns (B, oh, ow, cout) bf16 pre-activation (consumer applies the ReLU)."""
    B = x_nhwc.shape[0]
    cin = x_nhwc.shape[-1]
    patches, oh, ow = _im2col(x_nhwc, kh, kw, stride, pad)
    K = kh * kw * cin
    Kg = group * K
    Ng = w_g.shape[1]
    cout = Ng // group

    M = B * oh * ow
    pm = patches.reshape(M, K).astype(jnp.bfloat16)

    # Pack `group` consecutive output pixels into one lane-dense row; pad rows
    # so the row tile divides evenly (all blocks full, all stores unmasked).
    dense = _round_up(M, group) // group
    td = _pick_row_tile(dense, TD_CONV)
    Md = _round_up(dense, td)
    pad_rows = Md * group - M
    if pad_rows:
        pm = jnp.pad(pm, ((0, pad_rows), (0, 0)))
    xg = pm.reshape(Md, Kg)

    out_g = pl.pallas_call(
        functools.partial(_conv_matmul_kernel, input_relu=input_relu),
        out_shape=jax.ShapeDtypeStruct((Md, Ng), jnp.bfloat16),
        grid=(Md // td,),
        in_specs=[
            pl.BlockSpec((td, Kg), lambda i: (i, 0)),     # grouped patch tile
            pl.BlockSpec((Kg, Ng), lambda i: (0, 0)),     # weight: grid-invariant
            pl.BlockSpec((1, Ng), lambda i: (0, 0)),      # bias:   grid-invariant
        ],
        out_specs=pl.BlockSpec((td, Ng), lambda i: (i, 0)),
        compiler_params=_mosaic_params(),
        cost_estimate=pl.CostEstimate(
            flops=2 * Md * Kg * Ng,
            transcendentals=0,
            bytes_accessed=2 * Md * Kg + 2 * Kg * Ng + 4 * Ng + 2 * Md * Ng,
        ),
    )(xg, w_g, b_g)

    # Identical row-major bit layout: ungroup, drop padding, back to NHWC.
    return out_g.reshape(Md * group, cout)[:M].reshape(B, oh, ow, cout), oh, ow


def fc_head(flat_bf16, w1p, b1p, w2p, b2p):
    """Fused fc1+relu+fc2+softmax, tiled over batch rows; 128-lane outputs."""
    B, K = flat_bf16.shape
    Np = w1p.shape[1]                                    # 128 (padded)
    tb = _pick_row_tile(B, TB_FC)
    Bp = _round_up(B, tb)
    x = flat_bf16 if Bp == B else jnp.pad(flat_bf16, ((0, Bp - B), (0, 0)))

    fc1_p, logit_p, prob_p = pl.pallas_call(
        functools.partial(_fc_head_kernel, n_classes=N_CLASSES),
        out_shape=(
            jax.ShapeDtypeStruct((Bp, Np), jnp.float32),   # fc1 pre-act (padded)
            jax.ShapeDtypeStruct((Bp, Np), jnp.float32),   # logits (padded)
            jax.ShapeDtypeStruct((Bp, Np), jnp.float32),   # softmax probs (padded)
        ),
        grid=(Bp // tb,),
        in_specs=[
            pl.BlockSpec((tb, K), lambda i: (i, 0)),
            pl.BlockSpec((K, Np), lambda i: (0, 0)),
            pl.BlockSpec((1, Np), lambda i: (0, 0)),
            pl.BlockSpec((Np, Np), lambda i: (0, 0)),
            pl.BlockSpec((1, Np), lambda i: (0, 0)),
        ],
        out_specs=(
            pl.BlockSpec((tb, Np), lambda i: (i, 0)),
            pl.BlockSpec((tb, Np), lambda i: (i, 0)),
            pl.BlockSpec((tb, Np), lambda i: (i, 0)),
        ),
        compiler_params=_mosaic_params(),
        cost_estimate=pl.CostEstimate(
            flops=2 * Bp * Np * (K + Np),
            transcendentals=Bp * Np,
            bytes_accessed=2 * Bp * K + 2 * K * Np + 2 * Np * Np
                           + 8 * Np + 12 * Bp * Np,
        ),
    )(x, w1p, b1p, w2p, b2p)
    return fc1_p[:B], logit_p[:B], prob_p[:B]


# ----------------------------- params ----------------------------------------

def init_params(key):
    """PyTorch-default-style uniform(-1/sqrt(fan_in), +) init, PyTorch layouts."""
    ks = jax.random.split(key, 8)

    def u(k, shape, fan_in):
        lim = 1.0 / jnp.sqrt(jnp.float32(fan_in))
        return jax.random.uniform(k, shape, jnp.float32, -lim, lim)

    return {
        "w1": u(ks[0], (16, 1, 4, 4), 1 * 4 * 4),
        "b1": u(ks[1], (16,), 1 * 4 * 4),
        "w2": u(ks[2], (32, 16, 4, 4), 16 * 4 * 4),
        "b2": u(ks[3], (32,), 16 * 4 * 4),
        "w_fc1": u(ks[4], (100, 32 * 7 * 7), 32 * 7 * 7),   # Linear: (out, in)
        "b_fc1": u(ks[5], (100,), 32 * 7 * 7),
        "w_fc2": u(ks[6], (10, 100), 100),
        "b_fc2": u(ks[7], (10,), 100),
    }


def prepare_params(p):
    """One-time re-layout outside the hot path:
      * conv OIHW -> (kh*kw*cin, cout) -> block-diagonal grouped (G*K, G*cout)
        bf16 weight so the conv output rows are 128-lane dense,
      * fc (out,in) -> (in,out) padded to 128 output lanes, bf16,
      * biases tiled/padded to the same lane widths, kept f32."""
    def conv_w(w_oihw):
        cout, cin, kh, kw = w_oihw.shape
        return jnp.transpose(w_oihw, (2, 3, 1, 0)).reshape(kh * kw * cin, cout)

    def grouped(w2d, g):                    # block-diagonal: g copies of w2d
        return jnp.kron(jnp.eye(g, dtype=w2d.dtype), w2d).astype(jnp.bfloat16)

    w1m = conv_w(p["w1"])                   # (16, 16)
    w2m = conv_w(p["w2"])                   # (256, 32)
    return {
        "w1g": grouped(w1m, G1),                                          # (128, 128)
        "b1g": jnp.tile(p["b1"], G1).reshape(1, -1).astype(jnp.float32),
        "w2g": grouped(w2m, G2),                                          # (1024, 128)
        "b2g": jnp.tile(p["b2"], G2).reshape(1, -1).astype(jnp.float32),
        "wf1p": jnp.pad(p["w_fc1"].T, ((0, 0), (0, FC_PAD - N_FC1))
                        ).astype(jnp.bfloat16),                           # (1568, 128)
        "bf1p": jnp.pad(p["b_fc1"], (0, FC_PAD - N_FC1)
                        ).reshape(1, -1).astype(jnp.float32),
        "wf2p": jnp.pad(p["w_fc2"].T, ((0, FC_PAD - N_FC1), (0, FC_PAD - N_CLASSES))
                        ).astype(jnp.bfloat16),                           # (128, 128)
        "bf2p": jnp.pad(p["b_fc2"], (0, FC_PAD - N_CLASSES)
                        ).reshape(1, -1).astype(jnp.float32),
    }


# ----------------------------- model ----------------------------------------

def cnn_forward(prep, x_nchw, logit_only=False):
    bs = x_nchw.shape[0]
    x_nhwc = jnp.transpose(x_nchw, (0, 2, 3, 1))

    # conv1: emits pre-activation only (bf16); its ReLU is fused into conv2.
    c1, oh1, ow1 = conv2d_grouped(x_nhwc, prep["w1g"], prep["b1g"], group=G1,
                                  kh=4, kw=4, stride=2, pad=1, input_relu=False)
    # conv2: consumes conv1 pre-act; ReLU applied in-kernel on the bf16 patches.
    c2, oh2, ow2 = conv2d_grouped(c1, prep["w2g"], prep["b2g"], group=G2,
                                  kh=4, kw=4, stride=2, pad=1, input_relu=True)

    # flatten in (h, w, c) order == PyTorch permute(0,2,3,1).view(bs, -1);
    # the ReLU of conv2 is fused into the FC-head kernel.
    flat = c2.reshape(bs, oh2 * ow2 * c2.shape[-1])       # already bf16

    fc1_p, logits_p, probs_p = fc_head(flat, prep["wf1p"], prep["bf1p"],
                                       prep["wf2p"], prep["bf2p"])
    logits = logits_p[:, :N_CLASSES]
    if logit_only:
        return logits

    probs = probs_p[:, :N_CLASSES]
    inter = {
        "conv1": jnp.transpose(c1, (0, 3, 1, 2)).astype(jnp.float32),   # NCHW pre-ReLU
        "conv2": jnp.transpose(c2, (0, 3, 1, 2)).astype(jnp.float32),
        "fc1": fc1_p[:, :N_FC1],
    }
    return probs, logits, inter


# ----------------------------- pure-JAX reference (sanity check) ------------

def ref_forward(params, x):
    dn = ("NCHW", "OIHW", "NCHW")
    c1 = jax.lax.conv_general_dilated(
        x, params["w1"], (2, 2), ((1, 1), (1, 1)), dimension_numbers=dn
    ) + params["b1"][None, :, None, None]
    c1r = jnp.maximum(c1, 0.0)
    c2 = jax.lax.conv_general_dilated(
        c1r, params["w2"], (2, 2), ((1, 1), (1, 1)), dimension_numbers=dn
    ) + params["b2"][None, :, None, None]
    c2r = jnp.maximum(c2, 0.0)
    flat = jnp.transpose(c2r, (0, 2, 3, 1)).reshape(x.shape[0], -1)
    f1 = flat @ params["w_fc1"].T + params["b_fc1"]
    f1r = jnp.maximum(f1, 0.0)
    logits = f1r @ params["w_fc2"].T + params["b_fc2"]
    return jax.nn.softmax(logits, axis=-1), logits, {"conv1": c1, "conv2": c2, "fc1": f1}


# ----------------------------- main ------------------------------------------

if __name__ == "__main__":
    key = jax.random.PRNGKey(0)
    kx, kp = jax.random.split(key)
    params = init_params(kp)
    prep = prepare_params(params)

    # Forward requires 28x28 single-channel input (fc1 expects 32*7*7 features).
    x = jax.random.normal(kx, (2, 1, 28, 28), dtype=jnp.float32)

    fwd = jax.jit(cnn_forward)
    probs, logits, inter = jax.block_until_ready(fwd(prep, x))

    # Shape checks (match PyTorch module exactly)
    assert probs.shape == (2, 10)
    assert logits.shape == (2, 10)
    assert inter["conv1"].shape == (2, 16, 14, 14)
    assert inter["conv2"].shape == (2, 32, 7, 7)
    assert inter["fc1"].shape == (2, 100)

    # Numerical check against pure-JAX f32 reference (bf16 MXU inputs and bf16
    # inter-layer activations -> 2e-2 tolerance)
    r_probs, r_logits, r_inter = jax.block_until_ready(ref_forward(params, x))
    for a, b in [
        (probs, r_probs),
        (logits, r_logits),
        (inter["conv1"], r_inter["conv1"]),
        (inter["conv2"], r_inter["conv2"]),
        (inter["fc1"], r_inter["fc1"]),
    ]:
        assert jnp.allclose(a, b, rtol=2e-2, atol=2e-2), "mismatch vs reference"

    print("KERNEL_OK")
</pallas_src>

<mosaic_0001>
module attributes {stable_mosaic.version = 11 : i64} {
  func.func @_conv_matmul_kernel(%arg0: i32, %arg1: memref<32x128xbf16, #tpu.memory_space<vmem>>, %arg2: memref<128x128xbf16, #tpu.memory_space<vmem>>, %arg3: memref<1x128xf32, #tpu.memory_space<vmem>>, %arg4: memref<32x128xbf16, #tpu.memory_space<vmem>>) attributes {dimension_semantics = [#tpu.dimension_semantics<parallel>], iteration_bounds = array<i64: 2>, scalar_prefetch = 0 : i64, scratch_operands = 0 : i64, tpu.core_type = #tpu.core_type<tc>, window_params = [{transform_indices = @transform_0, window_bounds = array<i64: 32, 128>}, {pipeline_mode = #tpu.pipeline_mode<synchronous>, transform_indices = @transform_1, window_bounds = array<i64: 128, 128>}, {pipeline_mode = #tpu.pipeline_mode<synchronous>, transform_indices = @transform_2, window_bounds = array<i64: 1, 128>}, {transform_indices = @transform_3, window_bounds = array<i64: 32, 128>}]} {
    %c0 = arith.constant 0 : index
    %c0_0 = arith.constant 0 : index
    %0 = vector.load %arg1[%c0, %c0_0] : memref<32x128xbf16, #tpu.memory_space<vmem>>, vector<32x128xbf16>
    %c0_1 = arith.constant 0 : index
    %c0_2 = arith.constant 0 : index
    %1 = vector.load %arg2[%c0_1, %c0_2] : memref<128x128xbf16, #tpu.memory_space<vmem>>, vector<128x128xbf16>
    %cst = arith.constant dense<0.000000e+00> : vector<32x128xf32>
    %2 = tpu.matmul %0, %1, %cst {dimension_numbers = #tpu.dot_dimension_numbers<[1], [0], [0], [1], [0, 0, 1, 1], [], []>} : vector<32x128xbf16>, vector<128x128xbf16>, vector<32x128xf32> -> vector<32x128xf32>
    %c0_3 = arith.constant 0 : index
    %c0_4 = arith.constant 0 : index
    %3 = vector.load %arg3[%c0_3, %c0_4] : memref<1x128xf32, #tpu.memory_space<vmem>>, vector<1x128xf32>
    %4 = vector.broadcast %3 : vector<1x128xf32> to vector<32x128xf32>
    %5 = arith.addf %2, %4 : vector<32x128xf32>
    %6 = arith.truncf %5 : vector<32x128xf32> to vector<32x128xbf16>
    %c0_5 = arith.constant 0 : index
    %c0_6 = arith.constant 0 : index
    %7 = vector.load %arg4[%c0_5, %c0_6] : memref<32x128xbf16, #tpu.memory_space<vmem>>, vector<32x128xbf16>
    tpu.vector_store %arg4[%c0_5, %c0_6], %6 {strides = array<i32>} : memref<32x128xbf16, #tpu.memory_space<vmem>>, vector<32x128xbf16>,
    return
  }
  func.func @transform_0(%arg0: i32) -> (i32, i32) {
    %c0_i32 = arith.constant 0 : i32
    %c0_i32_0 = arith.constant 0 : i32
    return %arg0, %c0_i32 : i32, i32
  }
  func.func @transform_1(%arg0: i32) -> (i32, i32) {
    %c0_i32 = arith.constant 0 : i32
    %c0_i32_0 = arith.constant 0 : i32
    %c0_i32_1 = arith.constant 0 : i32
    return %c0_i32, %c0_i32_0 : i32, i32
  }
  func.func @transform_2(%arg0: i32) -> (i32, i32) {
    %c0_i32 = arith.constant 0 : i32
    %c0_i32_0 = arith.constant 0 : i32
    %c0_i32_1 = arith.constant 0 : i32
    return %c0_i32, %c0_i32_0 : i32, i32
  }
  func.func @transform_3(%arg0: i32) -> (i32, i32) {
    %c0_i32 = arith.constant 0 : i32
    %c0_i32_0 = arith.constant 0 : i32
    return %arg0, %c0_i32 : i32, i32
  }
}

module attributes {stable_mosaic.version = 11 : i64} {
  func.func @_conv_matmul_kernel(%arg0: i32, %arg1: memref<16x1024xbf16, #tpu.memory_space<vmem>>, %arg2: memref<1024x128xbf16, #tpu.memory_space<vmem>>, %arg3: memref<1x128xf32, #tpu.memory_space<vmem>>, %arg4: memref<16x128xbf16, #tpu.memory_space<vmem>>) attributes {dimension_semantics = [#tpu.dimension_semantics<parallel>], iteration_bounds = array<i64: 2>, scalar_prefetch = 0 : i64, scratch_operands = 0 : i64, tpu.core_type = #tpu.core_type<tc>, window_params = [{transform_indices = @transform_0, window_bounds = array<i64: 16, 1024>}, {pipeline_mode = #tpu.pipeline_mode<synchronous>, transform_indices = @transform_1, window_bounds = array<i64: 1024, 128>}, {pipeline_mode = #tpu.pipeline_mode<synchronous>, transform_indices = @transform_2, window_bounds = array<i64: 1, 128>}, {transform_indices = @transform_3, window_bounds = array<i64: 16, 128>}]} {
    %c0 = arith.constant 0 : index
    %c0_0 = arith.constant 0 : index
    %0 = vector.load %arg1[%c0, %c0_0] : memref<16x1024xbf16, #tpu.memory_space<vmem>>, vector<16x1024xbf16>
    %cst = arith.constant 0.000000e+00 : bf16
    %1 = vector.broadcast %cst : bf16 to vector<16x1024xbf16>
    %2 = arith.maximumf %0, %1 : vector<16x1024xbf16>
    %c0_1 = arith.constant 0 : index
    %c0_2 = arith.constant 0 : index
    %3 = vector.load %arg2[%c0_1, %c0_2] : memref<1024x128xbf16, #tpu.memory_space<vmem>>, vector<1024x128xbf16>
    %cst_3 = arith.constant dense<0.000000e+00> : vector<16x128xf32>
    %4 = tpu.matmul %2, %3, %cst_3 {dimension_numbers = #tpu.dot_dimension_numbers<[1], [0], [0], [1], [0, 0, 1, 1], [], []>} : vector<16x1024xbf16>, vector<1024x128xbf16>, vector<16x128xf32> -> vector<16x128xf32>
    %c0_4 = arith.constant 0 : index
    %c0_5 = arith.constant 0 : index
    %5 = vector.load %arg3[%c0_4, %c0_5] : memref<1x128xf32, #tpu.memory_space<vmem>>, vector<1x128xf32>
    %6 = vector.broadcast %5 : vector<1x128xf32> to vector<16x128xf32>
    %7 = arith.addf %4, %6 : vector<16x128xf32>
    %8 = arith.truncf %7 : vector<16x128xf32> to vector<16x128xbf16>
    %c0_6 = arith.constant 0 : index
    %c0_7 = arith.constant 0 : index
    %9 = vector.load %arg4[%c0_6, %c0_7] : memref<16x128xbf16, #tpu.memory_space<vmem>>, vector<16x128xbf16>
    tpu.vector_store %arg4[%c0_6, %c0_7], %8 {strides = array<i32>} : memref<16x128xbf16, #tpu.memory_space<vmem>>, vector<16x128xbf16>,
    return
  }
  func.func @transform_0(%arg0: i32) -> (i32, i32) {
    %c0_i32 = arith.constant 0 : i32
    %c0_i32_0 = arith.constant 0 : i32
    return %arg0, %c0_i32 : i32, i32
  }
  func.func @transform_1(%arg0: i32) -> (i32, i32) {
    %c0_i32 = arith.constant 0 : i32
    %c0_i32_0 = arith.constant 0 : i32
    %c0_i32_1 = arith.constant 0 : i32
    return %c0_i32, %c0_i32_0 : i32, i32
  }
  func.func @transform_2(%arg0: i32) -> (i32, i32) {
    %c0_i32 = arith.constant 0 : i32
    %c0_i32_0 = arith.constant 0 : i32
    %c0_i32_1 = arith.constant 0 : i32
    return %c0_i32, %c0_i32_0 : i32, i32
  }
  func.func @transform_3(%arg0: i32) -> (i32, i32) {
    %c0_i32 = arith.constant 0 : i32
    %c0_i32_0 = arith.constant 0 : i32
    return %arg0, %c0_i32 : i32, i32
  }
}

module attributes {stable_mosaic.version = 11 : i64} {
  func.func @_fc_head_kernel(%arg0: i32, %arg1: memref<2x1568xbf16, #tpu.memory_space<vmem>>, %arg2: memref<1568x128xbf16, #tpu.memory_space<vmem>>, %arg3: memref<1x128xf32, #tpu.memory_space<vmem>>, %arg4: memref<128x128xbf16, #tpu.memory_space<vmem>>, %arg5: memref<1x128xf32, #tpu.memory_space<vmem>>, %arg6: memref<2x128xf32, #tpu.memory_space<vmem>>, %arg7: memref<2x128xf32, #tpu.memory_space<vmem>>, %arg8: memref<2x128xf32, #tpu.memory_space<vmem>>) attributes {dimension_semantics = [#tpu.dimension_semantics<parallel>], iteration_bounds = array<i64: 1>, scalar_prefetch = 0 : i64, scratch_operands = 0 : i64, tpu.core_type = #tpu.core_type<tc>, window_params = [{transform_indices = @transform_0, window_bounds = array<i64: 2, 1568>}, {pipeline_mode = #tpu.pipeline_mode<synchronous>, transform_indices = @transform_1, window_bounds = array<i64: 1568, 128>}, {pipeline_mode = #tpu.pipeline_mode<synchronous>, transform_indices = @transform_2, window_bounds = array<i64: 1, 128>}, {pipeline_mode = #tpu.pipeline_mode<synchronous>, transform_indices = @transform_3, window_bounds = array<i64: 128, 128>}, {pipeline_mode = #tpu.pipeline_mode<synchronous>, transform_indices = @transform_4, window_bounds = array<i64: 1, 128>}, {transform_indices = @transform_5, window_bounds = array<i64: 2, 128>}, {transform_indices = @transform_6, window_bounds = array<i64: 2, 128>}, {transform_indices = @transform_7, window_bounds = array<i64: 2, 128>}]} {
    %c0 = arith.constant 0 : index
    %c0_0 = arith.constant 0 : index
    %0 = vector.load %arg1[%c0, %c0_0] : memref<2x1568xbf16, #tpu.memory_space<vmem>>, vector<2x1568xbf16>
    %cst = arith.constant 0.000000e+00 : bf16
    %1 = vector.broadcast %cst : bf16 to vector<2x1568xbf16>
    %2 = arith.maximumf %0, %1 : vector<2x1568xbf16>
    %c0_1 = arith.constant 0 : index
    %c0_2 = arith.constant 0 : index
    %3 = vector.load %arg2[%c0_1, %c0_2] : memref<1568x128xbf16, #tpu.memory_space<vmem>>, vector<1568x128xbf16>
    %cst_3 = arith.constant dense<0.000000e+00> : vector<2x128xf32>
    %4 = tpu.matmul %2, %3, %cst_3 {dimension_numbers = #tpu.dot_dimension_numbers<[1], [0], [0], [1], [0, 0, 1, 1], [], []>} : vector<2x1568xbf16>, vector<1568x128xbf16>, vector<2x128xf32> -> vector<2x128xf32>
    %c0_4 = arith.constant 0 : index
    %c0_5 = arith.constant 0 : index
    %5 = vector.load %arg3[%c0_4, %c0_5] : memref<1x128xf32, #tpu.memory_space<vmem>>, vector<1x128xf32>
    %6 = vector.broadcast %5 : vector<1x128xf32> to vector<2x128xf32>
    %7 = arith.addf %4, %6 : vector<2x128xf32>
    %c0_6 = arith.constant 0 : index
    %c0_7 = arith.constant 0 : index
    %8 = vector.load %arg6[%c0_6, %c0_7] : memref<2x128xf32, #tpu.memory_space<vmem>>, vector<2x128xf32>
    tpu.vector_store %arg6[%c0_6, %c0_7], %7 {strides = array<i32>} : memref<2x128xf32, #tpu.memory_space<vmem>>, vector<2x128xf32>,
    %cst_8 = arith.constant 0.000000e+00 : f32
    %9 = vector.broadcast %cst_8 : f32 to vector<2x128xf32>
    %10 = arith.maximumf %7, %9 : vector<2x128xf32>
    %11 = arith.truncf %10 : vector<2x128xf32> to vector<2x128xbf16>
    %c0_9 = arith.constant 0 : index
    %c0_10 = arith.constant 0 : index
    %12 = vector.load %arg4[%c0_9, %c0_10] : memref<128x128xbf16, #tpu.memory_space<vmem>>, vector<128x128xbf16>
    %cst_11 = arith.constant dense<0.000000e+00> : vector<2x128xf32>
    %13 = tpu.matmul %11, %12, %cst_11 {dimension_numbers = #tpu.dot_dimension_numbers<[1], [0], [0], [1], [0, 0, 1, 1], [], []>} : vector<2x128xbf16>, vector<128x128xbf16>, vector<2x128xf32> -> vector<2x128xf32>
    %c0_12 = arith.constant 0 : index
    %c0_13 = arith.constant 0 : index
    %14 = vector.load %arg5[%c0_12, %c0_13] : memref<1x128xf32, #tpu.memory_space<vmem>>, vector<1x128xf32>
    %15 = vector.broadcast %14 : vector<1x128xf32> to vector<2x128xf32>
    %16 = arith.addf %13, %15 : vector<2x128xf32>
    %c0_14 = arith.constant 0 : index
    %c0_15 = arith.constant 0 : index
    %17 = vector.load %arg7[%c0_14, %c0_15] : memref<2x128xf32, #tpu.memory_space<vmem>>, vector<2x128xf32>
    tpu.vector_store %arg7[%c0_14, %c0_15], %16 {strides = array<i32>} : memref<2x128xf32, #tpu.memory_space<vmem>>, vector<2x128xf32>,
    %18 = tpu.iota {dimensions = array<i32: 1>} : vector<2x128xi32>
    %c10_i32 = arith.constant 10 : i32
    %19 = vector.broadcast %c10_i32 : i32 to vector<2x128xi32>
    %20 = arith.cmpi slt, %18, %19 : vector<2x128xi32>
    %cst_16 = arith.constant -1.000000e+30 : f32
    %21 = vector.broadcast %cst_16 : f32 to vector<2x128xf32>
    %22 = arith.select %20, %16, %21 : vector<2x128xi1>, vector<2x128xf32>
    %cst_17 = arith.constant dense<0xFF800000> : vector<2xf32>
    %23 = vector.multi_reduction <maximumf>, %22, %cst_17 [1] : vector<2x128xf32> to vector<2xf32>
    %24 = vector.shape_cast %23 : vector<2xf32> to vector<2x1xf32>
    %25 = vector.broadcast %24 : vector<2x1xf32> to vector<2x128xf32>
    %26 = arith.subf %22, %25 : vector<2x128xf32>
    %27 = math.exp %26 : vector<2x128xf32>
    %cst_18 = arith.constant 0.000000e+00 : f32
    %28 = vector.broadcast %cst_18 : f32 to vector<2x128xf32>
    %29 = arith.select %20, %27, %28 : vector<2x128xi1>, vector<2x128xf32>
    %cst_19 = arith.constant dense<0.000000e+00> : vector<2xf32>
    %30 = vector.multi_reduction <add>, %29, %cst_19 [1] : vector<2x128xf32> to vector<2xf32>
    %31 = vector.shape_cast %30 : vector<2xf32> to vector<2x1xf32>
    %32 = vector.broadcast %31 : vector<2x1xf32> to vector<2x128xf32>
    %33 = arith.divf %29, %32 : vector<2x128xf32>
    %c0_20 = arith.constant 0 : index
    %c0_21 = arith.constant 0 : index
    %34 = vector.load %arg8[%c0_20, %c0_21] : memref<2x128xf32, #tpu.memory_space<vmem>>, vector<2x128xf32>
    tpu.vector_store %arg8[%c0_20, %c0_21], %33 {strides = array<i32>} : memref<2x128xf32, #tpu.memory_space<vmem>>, vector<2x128xf32>,
    return
  }
  func.func @transform_0(%arg0: i32) -> (i32, i32) {
    %c0_i32 = arith.constant 0 : i32
    %c0_i32_0 = arith.constant 0 : i32
    return %arg0, %c0_i32 : i32, i32
  }
  func.func @transform_1(%arg0: i32) -> (i32, i32) {
    %c0_i32 = arith.constant 0 : i32
    %c0_i32_0 = arith.constant 0 : i32
    %c0_i32_1 = arith.constant 0 : i32
    return %c0_i32, %c0_i32_0 : i32, i32
  }
  func.func @transform_2(%arg0: i32) -> (i32, i32) {
    %c0_i32 = arith.constant 0 : i32
    %c0_i32_0 = arith.constant 0 : i32
    %c0_i32_1 = arith.constant 0 : i32
    return %c0_i32, %c0_i32_0 : i32, i32
  }
  func.func @transform_3(%arg0: i32) -> (i32, i32) {
    %c0_i32 = arith.constant 0 : i32
    %c0_i32_0 = arith.constant 0 : i32
    %c0_i32_1 = arith.constant 0 : i32
    return %c0_i32, %c0_i32_0 : i32, i32
  }
  func.func @transform_4(%arg0: i32) -> (i32, i32) {
    %c0_i32 = arith.constant 0 : i32
    %c0_i32_0 = arith.constant 0 : i32
    %c0_i32_1 = arith.constant 0 : i32
    return %c0_i32, %c0_i32_0 : i32, i32
  }
  func.func @transform_5(%arg0: i32) -> (i32, i32) {
    %c0_i32 = arith.constant 0 : i32
    %c0_i32_0 = arith.constant 0 : i32
    return %arg0, %c0_i32 : i32, i32
  }
  func.func @transform_6(%arg0: i32) -> (i32, i32) {
    %c0_i32 = arith.constant 0 : i32
    %c0_i32_0 = arith.constant 0 : i32
    return %arg0, %c0_i32 : i32, i32
  }
  func.func @transform_7(%arg0: i32) -> (i32, i32) {
    %c0_i32 = arith.constant 0 : i32
    %c0_i32_0 = arith.constant 0 : i32
    return %arg0, %c0_i32 : i32, i32
  }
}

</mosaic_0001>

<llo_original>
// kernel: cnn_forward.3
$region0: #{cnn_forward.3}
  #allocation0 [shape = 'u32[]', space=smem, size = 0x4, offset = 0x4, fixed_abs, tag = 'smem constant byte address 0x4 - core index']
  #allocation1 [shape = 'u32[144,128]{1,0:T(1,128)}', space=vmem, size = 0x12000, scoped, tag = 'internal scratch']
  %s0 = inlined_call_operand.vmem [shape: bf16[64,128], index: 0, kind: input, shape index: {}]
  %s1 = inlined_call_operand.vmem [shape: bf16[128,128], index: 1, kind: input, shape index: {}]
  %s2 = inlined_call_operand.vmem [shape: f32[1,128], index: 2, kind: input, shape index: {}]
  %s3 = inlined_call_operand.vmem [shape: bf16[64,128], index: 3, kind: output, shape index: {}]
  %s4 = sld [smem:[#allocation0]]
  $region45: #{cnn_forward.3} parent=0
    _
  %s6 = ssub.s32 1, %s4
  %s7 = scalar_select 0, %s6, %s4
  loop: start=0, step=1, limit=4
  $region2: #{cnn_forward.3} parent=0 // loop_pre_header
    _
  $region3: #{cnn_forward.3} parent=0 // loop_header
    %s9 = sphi 0, %s13
    %p10 = scmp.ge.s32.totalorder %s9, 4
    %s19 = sphi 0, %s21
    %s22 = sphi 0, %s19
    %s23 = sphi 0, %s22
    %s39 = sphi 0, %s23
    %s43 = sphi 0, %s43
    %s45 = sphi 0, %s43
    %s46 = sphi 0, %s45
    %s60 = sphi 0, %s46
    %s64 = sphi 0, %s64
    %s66 = sphi 0, %s64
    %s67 = sphi 0, %s66
    %s81 = sphi 0, %s67
    %s87 = sphi 0, %s89
    %s90 = sphi 0, %s87
    %s91 = sphi 0, %s90
    %s107 = sphi 0, %s91
  $region4: #{cnn_forward.3} parent=0 // loop_header_branch
    %12 = sbr.rel (%p10) target = $region8
  $region5: #{cnn_forward.3} parent=0 // loop_body
    %s14 = ssub.s32 %s9, 1
    %s15 = ssub.s32 %s9, 2
    %s16 = sadd.s32 %s9, 1
    %s17 = ssub.s32 %s9, %s16
    %p18 = scmp.eq.s32.totalorder %s17, 0
    %s20 = sadd.s32 %s19, 1
    %s21 = scalar_select %p18, %s19, %s20
    %p24 = pneg %p18
    %p25 = scmp.eq.s32.totalorder %s9, 1
    %p26 = por %p24, %p25
    %p27 = scmp.ne.s32.totalorder %s19, %s22
    %p28 = scmp.eq.s32.totalorder %s9, 0
    %p29 = por %p27, %p28
    %p30 = scmp.ne.s32.totalorder %s19, %s22
    %p31 = scmp.eq.s32.totalorder %s14, 1
    %p32 = por %p30, %p31
    %p33 = scmp.ne.s32.totalorder %s22, %s23
    %p34 = scmp.eq.s32.totalorder %s14, 0
    %p35 = por %p33, %p34
    %p36 = scmp.ne.s32.totalorder %s22, %s23
    %p37 = scmp.eq.s32.totalorder %s15, 1
    %p38 = por %p36, %p37
    %p40 = scmp.ne.s32.totalorder %s23, %s39
    %p41 = scmp.eq.s32.totalorder %s15, 0
    %p42 = por %p40, %p41
    %s44 = sadd.s32 %s43, 1
    %p47 = scmp.eq.s32.totalorder %s9, 1
    %p48 = scmp.ne.s32.totalorder %s43, %s45
    %p49 = scmp.eq.s32.totalorder %s9, 0
    %p50 = por %p48, %p49
    %p51 = scmp.ne.s32.totalorder %s43, %s45
    %p52 = scmp.eq.s32.totalorder %s14, 1
    %p53 = por %p51, %p52
    %p54 = scmp.ne.s32.totalorder %s45, %s46
    %p55 = scmp.eq.s32.totalorder %s14, 0
    %p56 = por %p54, %p55
    %p57 = scmp.ne.s32.totalorder %s45, %s46
    %p58 = scmp.eq.s32.totalorder %s15, 1
    %p59 = por %p57, %p58
    %p61 = scmp.ne.s32.totalorder %s46, %s60
    %p62 = scmp.eq.s32.totalorder %s15, 0
    %p63 = por %p61, %p62
    %s65 = sadd.s32 %s64, 1
    %p68 = scmp.eq.s32.totalorder %s9, 1
    %p69 = scmp.ne.s32.totalorder %s64, %s66
    %p70 = scmp.eq.s32.totalorder %s9, 0
    %p71 = por %p69, %p70
    %p72 = scmp.ne.s32.totalorder %s64, %s66
    %p73 = scmp.eq.s32.totalorder %s14, 1
    %p74 = por %p72, %p73
    %p75 = scmp.ne.s32.totalorder %s66, %s67
    %p76 = scmp.eq.s32.totalorder %s14, 0
    %p77 = por %p75, %p76
    %p78 = scmp.ne.s32.totalorder %s66, %s67
    %p79 = scmp.eq.s32.totalorder %s15, 1
    %p80 = por %p78, %p79
    %p82 = scmp.ne.s32.totalorder %s67, %s81
    %p83 = scmp.eq.s32.totalorder %s15, 0
    %p84 = por %p82, %p83
    %s85 = ssub.s32 %s9, %s16
    %p86 = scmp.eq.s32.totalorder %s85, 0
    %s88 = sadd.s32 %s87, 1
    %s89 = scalar_select %p86, %s87, %s88
    %p92 = pneg %p86
    %p93 = scmp.eq.s32.totalorder %s9, 1
    %p94 = por %p92, %p93
    %p95 = scmp.ne.s32.totalorder %s87, %s90
    %p96 = scmp.eq.s32.totalorder %s9, 0
    %p97 = por %p95, %p96
    %p98 = scmp.ne.s32.totalorder %s87, %s90
    %p99 = scmp.eq.s32.totalorder %s14, 1
    %p100 = por %p98, %p99
    %p101 = scmp.ne.s32.totalorder %s90, %s91
    %p102 = scmp.eq.s32.totalorder %s14, 0
    %p103 = por %p101, %p102
    %p104 = scmp.ne.s32.totalorder %s90, %s91
    %p105 = scmp.eq.s32.totalorder %s15, 1
    %p106 = por %p104, %p105
    %p108 = scmp.ne.s32.totalorder %s91, %s107
    %p109 = scmp.eq.s32.totalorder %s15, 0
    %p110 = por %p108, %p109
    %p111 = scmp.le.s32.totalorder 1, %s9
    %p112 = scmp.lt.s32.totalorder %s9, 3
    %p113 = pnand %p111, %p112
    %p114 = pneg %p113
    // Predicated region
    $region9: #{cnn_forward.3} parent=5 // pred_check
      _
    $region10: #{cnn_forward.3} parent=5 // pred_check_branch
      %116 = sbr.rel (%p113) target = $region12
    $region11: #{cnn_forward.3} parent=5 // pred_region
      %s117 = ssub.s32 %s9, 1
      // Predicated region
      $region13: #{cnn_forward.3} parent=11 // pred_check
        %p118 = pneg %p56
      $region14: #{cnn_forward.3} parent=11 // pred_check_branch
        %120 = sbr.rel (%p118) target = $region16
      $region15: #{cnn_forward.3} parent=11 // pred_region
        _
      $region16: #{cnn_forward.3} parent=11 // pred_fallthru
        _
      // Predicated region
      $region17: #{cnn_forward.3} parent=11 // pred_check
        %p121 = pneg %p77
      $region18: #{cnn_forward.3} parent=11 // pred_check_branch
        %123 = sbr.rel (%p121) target = $region20
      $region19: #{cnn_forward.3} parent=11 // pred_region
        _
      $region20: #{cnn_forward.3} parent=11 // pred_fallthru
        _
    $region12: #{cnn_forward.3} parent=5 // pred_fallthru
      _
    %p124 = scmp.lt.s32.totalorder %s9, 2
    // Predicated region
    $region21: #{cnn_forward.3} parent=5 // pred_check
      %p125 = pneg %p124
    $region22: #{cnn_forward.3} parent=5 // pred_check_branch
      %127 = sbr.rel (%p125) target = $region24
    $region23: #{cnn_forward.3} parent=5 // pred_region
      // Predicated region
      $region25: #{cnn_forward.3} parent=23 // pred_check
        %p128 = pneg %p29
      $region26: #{cnn_forward.3} parent=23 // pred_check_branch
        %130 = sbr.rel (%p128) target = $region28
      $region27: #{cnn_forward.3} parent=23 // pred_region
        %s131 = smul.u32 4, %s9
        %p132 = scmp.lt.s32.totalorder %s131, 7
        %s133 = scalar_select %p132, %s131, 7
        %s134 = smul.addr %s133, 4
        %s135 = scalar_lea.vmem %s0, %s134
        %s136 = smul.u32 4, %s9
      $region28: #{cnn_forward.3} parent=23 // pred_fallthru
        _
    $region24: #{cnn_forward.3} parent=5 // pred_fallthru
      _
    %p137 = scmp.le.s32.totalorder 1, %s9
    %p138 = scmp.lt.s32.totalorder %s9, 3
    %p139 = pnand %p137, %p138
    %p140 = pneg %p139
    // Predicated region
    $region29: #{cnn_forward.3} parent=5 // pred_check
      _
    $region30: #{cnn_forward.3} parent=5 // pred_check_branch
      %142 = sbr.rel (%p139) target = $region32
    $region31: #{cnn_forward.3} parent=5 // pred_region
      %s143 = ssub.s32 %s9, 1
      %s144 = smul.u32 4, %s14
      %p145 = scmp.lt.s32.totalorder %s144, 7
      %s146 = scalar_select %p145, %s144, 7
      %s147 = smul.addr %s146, 4
      %s148 = scalar_lea.vmem %s0, %s147
      %p149 = pneg %p35
      %p150 = pneg %p32
      %p151 = pneg %p56
      %p152 = pneg %p53
      %p153 = pneg %p77
      %p154 = pneg %p74
      %p155 = pneg %p103
      %p156 = pneg %p100
      %s157 = smul.u32 4, %s14
      %p158 = scmp.lt.s32.totalorder %s157, 7
      %s159 = scalar_select %p158, %s157, 7
      %s160 = smul.addr %s159, 4
      %s161 = scalar_lea.vmem %s3, %s160
      %s162 = smul.u32 4, %s14
      %p163 = scmp.lt.s32.totalorder %s162, 7
      %s164 = scalar_select %p163, %s162, 7
      %s165 = smul.addr %s164, 4
      %s166 = scalar_lea.vmem %s0, %s165
      %s167 = smul.u32 4, %s14
      %s168 = smul.u32 4, %s14
      %p169 = scmp.lt.s32.totalorder %s168, 7
      %s170 = scalar_select %p169, %s168, 7
      %s171 = smul.addr %s170, 4
      %s172 = scalar_lea.vmem %s3, %s171
      %s173 = smul.u32 4, %s14
      %v175 = vld [vmem:[%s166] sm:$0xf]
      %v176 = vld [vmem:[%s166 + $0x4] sm:$0xf]
      %v177 = vld [vmem:[%s166 + $0x8] sm:$0xf]
      %v178 = vld [vmem:[%s166 + $0xc] sm:$0xf]
      %v179 = vld [vmem:[%s1] sm:$0xf]
      %v180 = vld [vmem:[%s1 + $0x4] sm:$0xf]
      %v181 = vld [vmem:[%s1 + $0x8] sm:$0xf]
      %v182 = vld [vmem:[%s1 + $0xc] sm:$0xf]
      %v183 = vld [vmem:[%s1 + $0x10] sm:$0xf]
      %v184 = vld [vmem:[%s1 + $0x14] sm:$0xf]
      %v185 = vld [vmem:[%s1 + $0x18] sm:$0xf]
      %v186 = vld [vmem:[%s1 + $0x1c] sm:$0xf]
      %v187 = vld [vmem:[%s1 + $0x20] sm:$0xf]
      %v188 = vld [vmem:[%s1 + $0x24] sm:$0xf]
      %v189 = vld [vmem:[%s1 + $0x28] sm:$0xf]
      %v190 = vld [vmem:[%s1 + $0x2c] sm:$0xf]
      %v191 = vld [vmem:[%s1 + $0x30] sm:$0xf]
      %v192 = vld [vmem:[%s1 + $0x34] sm:$0xf]
      %v193 = vld [vmem:[%s1 + $0x38] sm:$0xf]
      %v194 = vld [vmem:[%s1 + $0x3c] sm:$0xf]
      %v195 = vld [vmem:[%s2] sm:$0x1]
      %v197 = vlaneseq
      %v198 = vshrl.u32 %v197, 7
      %v199 = vsub.s32 0, %v198
      %v200 = vrot.slane %v195, %v199
      %v206 = vunpack.c.l.b16 %v175
      %v207 = vunpack.c.l.b16 %v176
      %v208 = vunpack.c.l.b16 %v177
      %v209 = vunpack.c.l.b16 %v178
      %v210 = vpack.c.b16 %v207, %v206
      %v211 = vpack.c.b16 %v209, %v208
      %v230 = vunpack.c.l.b16 %v179
      %v231 = vunpack.c.l.b16 %v180
      %v232 = vunpack.c.l.b16 %v181
      %v233 = vunpack.c.l.b16 %v182
      %v234 = vunpack.c.l.b16 %v183
      %v235 = vunpack.c.l.b16 %v184
      %v236 = vunpack.c.l.b16 %v185
      %v237 = vunpack.c.l.b16 %v186
      %v238 = vunpack.c.l.b16 %v187
      %v239 = vunpack.c.l.b16 %v188
      %v240 = vunpack.c.l.b16 %v189
      %v241 = vunpack.c.l.b16 %v190
      %v242 = vunpack.c.l.b16 %v191
      %v243 = vunpack.c.l.b16 %v192
      %v244 = vunpack.c.l.b16 %v193
      %v245 = vunpack.c.l.b16 %v194
      %v246 = vpack.c.b16 %v231, %v230
      %v247 = vpack.c.b16 %v233, %v232
      %v248 = vpack.c.b16 %v235, %v234
      %v249 = vpack.c.b16 %v237, %v236
      %v250 = vpack.c.b16 %v239, %v238
      %v251 = vpack.c.b16 %v241, %v240
      %v252 = vpack.c.b16 %v243, %v242
      %v253 = vpack.c.b16 %v245, %v244
      %262 = vmatprep.subr.bf16.mxu0 0
      %263 = vmatpush1.bf16.msra.mxu0 %v246
      %264 = vmatprep.subr.bf16.mxu0 0
      %265 = vmatpush1.bf16.msra.mxu0 %v247
      %266 = vmatprep.subr.bf16.mxu0 0
      %267 = vmatpush1.bf16.msra.mxu0 %v248
      %268 = vmatprep.subr.bf16.mxu0 0
      %269 = vmatpush1.bf16.msra.mxu0 %v249
      %270 = vmatprep.subr.bf16.mxu0 0
      %271 = vmatpush1.bf16.msra.mxu0 %v250
      %272 = vmatprep.subr.bf16.mxu0 0
      %273 = vmatpush1.bf16.msra.mxu0 %v251
      %274 = vmatprep.subr.bf16.mxu0 0
      %275 = vmatpush1.bf16.msra.mxu0 %v252
      %276 = vmatprep.subr.bf16.mxu0 0
      %277 = vmatpush1.bf16.msra.mxu0 %v253
      %278 = vmatprep.subr.bf16.mxu0 0
      %279 = vmatpush1.bf16.msra.mxu0 0
      %280 = vmatprep.subr.bf16.mxu0 0
      %281 = vmatpush1.bf16.msra.mxu0 0
      %282 = vmatprep.subr.bf16.mxu0 0
      %283 = vmatpush1.bf16.msra.mxu0 0
      %284 = vmatprep.subr.bf16.mxu0 0
      %285 = vmatpush1.bf16.msra.mxu0 0
      %286 = vmatprep.subr.bf16.mxu0 0
      %287 = vmatpush1.bf16.msra.mxu0 0
      %288 = vmatprep.subr.bf16.mxu0 0
      %289 = vmatpush1.bf16.msra.mxu0 0
      %290 = vmatprep.subr.bf16.mxu0 0
      %291 = vmatpush1.bf16.msra.mxu0 0
      %292 = vmatprep.subr.bf16.mxu0 0
      %293 = vmatpush1.bf16.msra.mxu0 0
      %294 = vmatprep.mubr.bf16.mxu0 0
      %295 = vmatmul.mubr.bf16.gmra.mrb[0].mxu0 %v210
      %v296 = vpop.f32.mrb[0].mxu0
      %v297 = vadd.f32 %v200, %v296
      %v298 = vpop.f32.mrb[0].mxu0
      %v299 = vpop.f32.mrb[0].mxu0
      %v300 = vadd.f32 %v200, %v299
      %v301 = vpop.f32.mrb[0].mxu0
      %302 = vmatprep.mubr.bf16.mxu0 0
      %303 = vmatmul.mubr.bf16.gmra.mrb[0].mxu0 %v211
      %v304 = vpop.f32.mrb[0].mxu0
      %v305 = vadd.f32 %v200, %v304
      %v306 = vpop.f32.mrb[0].mxu0
      %v307 = vpop.f32.mrb[0].mxu0
      %v308 = vadd.f32 %v200, %v307
      %v309 = vpop.f32.mrb[0].mxu0
      %310 = vdwg.mxu0
      %v311 = vpack.c.bf16 %v300, %v297
      %v312 = vpack.c.bf16 %v308, %v305
      %v315 = vunpack.c.l.b16 %v311
      %v316 = vunpack.c.h.b16 %v311
      %v317 = vunpack.c.l.b16 %v312
      %v318 = vunpack.c.h.b16 %v312
      %v319 = vpack.c.b16 %v315, %v315
      %v320 = vpack.c.b16 %v316, %v316
      %v321 = vpack.c.b16 %v317, %v317
      %v322 = vpack.c.b16 %v318, %v318
      %327 = vst [vmem:[%s172] sm:$0xf] %v319
      %328 = vst [vmem:[%s172 + $0x4] sm:$0xf] %v320
      %329 = vst [vmem:[%s172 + $0x8] sm:$0xf] %v321
      %330 = vst [vmem:[%s172 + $0xc] sm:$0xf] %v322
      %s331 = smul.u32 4, %s14
      %p332 = scmp.lt.s32.totalorder %s331, 7
      %s333 = scalar_select %p332, %s331, 7
      %s334 = smul.addr %s333, 4
      %s335 = scalar_lea.vmem %s3, %s334
      // Predicated region
      $region33: #{cnn_forward.3} parent=31 // pred_check
        %p336 = pneg %p100
      $region34: #{cnn_forward.3} parent=31 // pred_check_branch
        %338 = sbr.rel (%p336) target = $region36
      $region35: #{cnn_forward.3} parent=31 // pred_region
        %s339 = smul.u32 4, %s14
      $region36: #{cnn_forward.3} parent=31 // pred_fallthru
        _
    $region32: #{cnn_forward.3} parent=5 // pred_fallthru
      _
    %p340 = scmp.le.s32.totalorder 2, %s9
    // Predicated region
    $region37: #{cnn_forward.3} parent=5 // pred_check
      %p341 = pneg %p340
    $region38: #{cnn_forward.3} parent=5 // pred_check_branch
      %343 = sbr.rel (%p341) target = $region40
    $region39: #{cnn_forward.3} parent=5 // pred_region
      %s344 = ssub.s32 %s9, 2
      // Predicated region
      $region41: #{cnn_forward.3} parent=39 // pred_check
        %p345 = pneg %p106
      $region42: #{cnn_forward.3} parent=39 // pred_check_branch
        %347 = sbr.rel (%p345) target = $region44
      $region43: #{cnn_forward.3} parent=39 // pred_region
        %s348 = smul.u32 4, %s15
        %p349 = scmp.lt.s32.totalorder %s348, 7
        %s350 = scalar_select %p349, %s348, 7
        %s351 = smul.addr %s350, 4
        %s352 = scalar_lea.vmem %s3, %s351
      $region44: #{cnn_forward.3} parent=39 // pred_fallthru
        _
    $region40: #{cnn_forward.3} parent=5 // pred_fallthru
      _
  $region6: #{cnn_forward.3} parent=0 // loop_footer
    %s13 = sadd.s32 1, %s9
  $region7: #{cnn_forward.3} parent=0 // loop_footer_branch
    %8 = sbr.rel target = $region3
  $region8: #{cnn_forward.3} parent=0 // loop_exit
    _

// kernel: cnn_forward.4
$region0: #{cnn_forward.4}
  #allocation0 [shape = 'u32[]', space=smem, size = 0x4, offset = 0x4, fixed_abs, tag = 'smem constant byte address 0x4 - core index']
  #allocation1 [shape = 'u32[144,128]{1,0:T(1,128)}', space=vmem, size = 0x12000, scoped, tag = 'internal scratch']
  %s0 = inlined_call_operand.vmem [shape: bf16[32,1024], index: 0, kind: input, shape index: {}]
  %s1 = inlined_call_operand.vmem [shape: bf16[1024,128], index: 1, kind: input, shape index: {}]
  %s2 = inlined_call_operand.vmem [shape: f32[1,128], index: 2, kind: input, shape index: {}]
  %s3 = inlined_call_operand.vmem [shape: bf16[32,128], index: 3, kind: output, shape index: {}]
  %s4 = sld [smem:[#allocation0]]
  $region45: #{cnn_forward.4} parent=0
    _
  %s6 = ssub.s32 1, %s4
  %s7 = scalar_select 0, %s6, %s4
  loop: start=0, step=1, limit=4
  $region2: #{cnn_forward.4} parent=0 // loop_pre_header
    _
  $region3: #{cnn_forward.4} parent=0 // loop_header
    %s9 = sphi 0, %s13
    %p10 = scmp.ge.s32.totalorder %s9, 4
    %s19 = sphi 0, %s21
    %s22 = sphi 0, %s19
    %s23 = sphi 0, %s22
    %s39 = sphi 0, %s23
    %s43 = sphi 0, %s43
    %s45 = sphi 0, %s43
    %s46 = sphi 0, %s45
    %s60 = sphi 0, %s46
    %s64 = sphi 0, %s64
    %s66 = sphi 0, %s64
    %s67 = sphi 0, %s66
    %s81 = sphi 0, %s67
    %s87 = sphi 0, %s89
    %s90 = sphi 0, %s87
    %s91 = sphi 0, %s90
    %s107 = sphi 0, %s91
  $region4: #{cnn_forward.4} parent=0 // loop_header_branch
    %12 = sbr.rel (%p10) target = $region8
  $region5: #{cnn_forward.4} parent=0 // loop_body
    %s14 = ssub.s32 %s9, 1
    %s15 = ssub.s32 %s9, 2
    %s16 = sadd.s32 %s9, 1
    %s17 = ssub.s32 %s9, %s16
    %p18 = scmp.eq.s32.totalorder %s17, 0
    %s20 = sadd.s32 %s19, 1
    %s21 = scalar_select %p18, %s19, %s20
    %p24 = pneg %p18
    %p25 = scmp.eq.s32.totalorder %s9, 1
    %p26 = por %p24, %p25
    %p27 = scmp.ne.s32.totalorder %s19, %s22
    %p28 = scmp.eq.s32.totalorder %s9, 0
    %p29 = por %p27, %p28
    %p30 = scmp.ne.s32.totalorder %s19, %s22
    %p31 = scmp.eq.s32.totalorder %s14, 1
    %p32 = por %p30, %p31
    %p33 = scmp.ne.s32.totalorder %s22, %s23
    %p34 = scmp.eq.s32.totalorder %s14, 0
    %p35 = por %p33, %p34
    %p36 = scmp.ne.s32.totalorder %s22, %s23
    %p37 = scmp.eq.s32.totalorder %s15, 1
    %p38 = por %p36, %p37
    %p40 = scmp.ne.s32.totalorder %s23, %s39
    %p41 = scmp.eq.s32.totalorder %s15, 0
    %p42 = por %p40, %p41
    %s44 = sadd.s32 %s43, 1
    %p47 = scmp.eq.s32.totalorder %s9, 1
    %p48 = scmp.ne.s32.totalorder %s43, %s45
    %p49 = scmp.eq.s32.totalorder %s9, 0
    %p50 = por %p48, %p49
    %p51 = scmp.ne.s32.totalorder %s43, %s45
    %p52 = scmp.eq.s32.totalorder %s14, 1
    %p53 = por %p51, %p52
    %p54 = scmp.ne.s32.totalorder %s45, %s46
    %p55 = scmp.eq.s32.totalorder %s14, 0
    %p56 = por %p54, %p55
    %p57 = scmp.ne.s32.totalorder %s45, %s46
    %p58 = scmp.eq.s32.totalorder %s15, 1
    %p59 = por %p57, %p58
    %p61 = scmp.ne.s32.totalorder %s46, %s60
    %p62 = scmp.eq.s32.totalorder %s15, 0
    %p63 = por %p61, %p62
    %s65 = sadd.s32 %s64, 1
    %p68 = scmp.eq.s32.totalorder %s9, 1
    %p69 = scmp.ne.s32.totalorder %s64, %s66
    %p70 = scmp.eq.s32.totalorder %s9, 0
    %p71 = por %p69, %p70
    %p72 = scmp.ne.s32.totalorder %s64, %s66
    %p73 = scmp.eq.s32.totalorder %s14, 1
    %p74 = por %p72, %p73
    %p75 = scmp.ne.s32.totalorder %s66, %s67
    %p76 = scmp.eq.s32.totalorder %s14, 0
    %p77 = por %p75, %p76
    %p78 = scmp.ne.s32.totalorder %s66, %s67
    %p79 = scmp.eq.s32.totalorder %s15, 1
    %p80 = por %p78, %p79
    %p82 = scmp.ne.s32.totalorder %s67, %s81
    %p83 = scmp.eq.s32.totalorder %s15, 0
    %p84 = por %p82, %p83
    %s85 = ssub.s32 %s9, %s16
    %p86 = scmp.eq.s32.totalorder %s85, 0
    %s88 = sadd.s32 %s87, 1
    %s89 = scalar_select %p86, %s87, %s88
    %p92 = pneg %p86
    %p93 = scmp.eq.s32.totalorder %s9, 1
    %p94 = por %p92, %p93
    %p95 = scmp.ne.s32.totalorder %s87, %s90
    %p96 = scmp.eq.s32.totalorder %s9, 0
    %p97 = por %p95, %p96
    %p98 = scmp.ne.s32.totalorder %s87, %s90
    %p99 = scmp.eq.s32.totalorder %s14, 1
    %p100 = por %p98, %p99
    %p101 = scmp.ne.s32.totalorder %s90, %s91
    %p102 = scmp.eq.s32.totalorder %s14, 0
    %p103 = por %p101, %p102
    %p104 = scmp.ne.s32.totalorder %s90, %s91
    %p105 = scmp.eq.s32.totalorder %s15, 1
    %p106 = por %p104, %p105
    %p108 = scmp.ne.s32.totalorder %s91, %s107
    %p109 = scmp.eq.s32.totalorder %s15, 0
    %p110 = por %p108, %p109
    %p111 = scmp.le.s32.totalorder 1, %s9
    %p112 = scmp.lt.s32.totalorder %s9, 3
    %p113 = pnand %p111, %p112
    %p114 = pneg %p113
    // Predicated region
    $region9: #{cnn_forward.4} parent=5 // pred_check
      _
    $region10: #{cnn_forward.4} parent=5 // pred_check_branch
      %116 = sbr.rel (%p113) target = $region12
    $region11: #{cnn_forward.4} parent=5 // pred_region
      %s117 = ssub.s32 %s9, 1
      // Predicated region
      $region13: #{cnn_forward.4} parent=11 // pred_check
        %p118 = pneg %p56
      $region14: #{cnn_forward.4} parent=11 // pred_check_branch
        %120 = sbr.rel (%p118) target = $region16
      $region15: #{cnn_forward.4} parent=11 // pred_region
        _
      $region16: #{cnn_forward.4} parent=11 // pred_fallthru
        _
      // Predicated region
      $region17: #{cnn_forward.4} parent=11 // pred_check
        %p121 = pneg %p77
      $region18: #{cnn_forward.4} parent=11 // pred_check_branch
        %123 = sbr.rel (%p121) target = $region20
      $region19: #{cnn_forward.4} parent=11 // pred_region
        _
      $region20: #{cnn_forward.4} parent=11 // pred_fallthru
        _
    $region12: #{cnn_forward.4} parent=5 // pred_fallthru
      _
    %p124 = scmp.lt.s32.totalorder %s9, 2
    // Predicated region
    $region21: #{cnn_forward.4} parent=5 // pred_check
      %p125 = pneg %p124
    $region22: #{cnn_forward.4} parent=5 // pred_check_branch
      %127 = sbr.rel (%p125) target = $region24
    $region23: #{cnn_forward.4} parent=5 // pred_region
      // Predicated region
      $region25: #{cnn_forward.4} parent=23 // pred_check
        %p128 = pneg %p29
      $region26: #{cnn_forward.4} parent=23 // pred_check_branch
        %130 = sbr.rel (%p128) target = $region28
      $region27: #{cnn_forward.4} parent=23 // pred_region
        %s131 = smul.u32 2, %s9
        %p132 = scmp.lt.s32.totalorder %s131, 3
        %s133 = scalar_select %p132, %s131, 3
        %s134 = smul.addr %s133, 8
        %s135 = smul.addr %s134, 4
        %s136 = scalar_lea.vmem %s0, %s135
        %s137 = smul.u32 2, %s9
      $region28: #{cnn_forward.4} parent=23 // pred_fallthru
        _
    $region24: #{cnn_forward.4} parent=5 // pred_fallthru
      _
    %p138 = scmp.le.s32.totalorder 1, %s9
    %p139 = scmp.lt.s32.totalorder %s9, 3
    %p140 = pnand %p138, %p139
    %p141 = pneg %p140
    // Predicated region
    $region29: #{cnn_forward.4} parent=5 // pred_check
      _
    $region30: #{cnn_forward.4} parent=5 // pred_check_branch
      %143 = sbr.rel (%p140) target = $region32
    $region31: #{cnn_forward.4} parent=5 // pred_region
      %s144 = ssub.s32 %s9, 1
      %s145 = smul.u32 2, %s14
      %p146 = scmp.lt.s32.totalorder %s145, 3
      %s147 = scalar_select %p146, %s145, 3
      %s148 = smul.addr %s147, 8
      %s149 = smul.addr %s148, 4
      %s150 = scalar_lea.vmem %s0, %s149
      %p151 = pneg %p35
      %p152 = pneg %p32
      %p153 = pneg %p56
      %p154 = pneg %p53
      %p155 = pneg %p77
      %p156 = pneg %p74
      %p157 = pneg %p103
      %p158 = pneg %p100
      %s159 = smul.u32 2, %s14
      %p160 = scmp.lt.s32.totalorder %s159, 3
      %s161 = scalar_select %p160, %s159, 3
      %s162 = smul.addr %s161, 4
      %s163 = scalar_lea.vmem %s3, %s162
      %s164 = smul.u32 2, %s14
      %p165 = scmp.lt.s32.totalorder %s164, 3
      %s166 = scalar_select %p165, %s164, 3
      %s167 = smul.addr %s166, 8
      %s168 = smul.addr %s167, 4
      %s169 = scalar_lea.vmem %s0, %s168
      %s170 = smul.u32 2, %s14
      %s171 = smul.u32 2, %s14
      %p172 = scmp.lt.s32.totalorder %s171, 3
      %s173 = scalar_select %p172, %s171, 3
      %s174 = smul.addr %s173, 4
      %s175 = scalar_lea.vmem %s3, %s174
      %s176 = smul.u32 2, %s14
      %v178 = vld [vmem:[%s169] sm:$0xff]
      %v179 = vld [vmem:[%s169 + $0x8] sm:$0xff]
      %v180 = vld [vmem:[%s169 + $0x10] sm:$0xff]
      %v181 = vld [vmem:[%s169 + $0x18] sm:$0xff]
      %v182 = vld [vmem:[%s169 + $0x20] sm:$0xff]
      %v183 = vld [vmem:[%s169 + $0x28] sm:$0xff]
      %v184 = vld [vmem:[%s169 + $0x30] sm:$0xff]
      %v185 = vld [vmem:[%s169 + $0x38] sm:$0xff]
      %v186 = vmax.bf16 %v178, 0
      %v187 = vmax.bf16 %v179, 0
      %v188 = vmax.bf16 %v180, 0
      %v189 = vmax.bf16 %v181, 0
      %v190 = vmax.bf16 %v182, 0
      %v191 = vmax.bf16 %v183, 0
      %v192 = vmax.bf16 %v184, 0
      %v193 = vmax.bf16 %v185, 0
      %v194 = vld [vmem:[%s1] sm:$0xf]
      %v195 = vld [vmem:[%s1 + $0x4] sm:$0xf]
      %v196 = vld [vmem:[%s1 + $0x8] sm:$0xf]
      %v197 = vld [vmem:[%s1 + $0xc] sm:$0xf]
      %v198 = vld [vmem:[%s1 + $0x10] sm:$0xf]
      %v199 = vld [vmem:[%s1 + $0x14] sm:$0xf]
      %v200 = vld [vmem:[%s1 + $0x18] sm:$0xf]
      %v201 = vld [vmem:[%s1 + $0x1c] sm:$0xf]
      %v202 = vld [vmem:[%s1 + $0x20] sm:$0xf]
      %v203 = vld [vmem:[%s1 + $0x24] sm:$0xf]
      %v204 = vld [vmem:[%s1 + $0x28] sm:$0xf]
      %v205 = vld [vmem:[%s1 + $0x2c] sm:$0xf]
      %v206 = vld [vmem:[%s1 + $0x30] sm:$0xf]
      %v207 = vld [vmem:[%s1 + $0x34] sm:$0xf]
      %v208 = vld [vmem:[%s1 + $0x38] sm:$0xf]
      %v209 = vld [vmem:[%s1 + $0x3c] sm:$0xf]
      %v210 = vld [vmem:[%s1 + $0x40] sm:$0xf]
      %v211 = vld [vmem:[%s1 + $0x44] sm:$0xf]
      %v212 = vld [vmem:[%s1 + $0x48] sm:$0xf]
      %v213 = vld [vmem:[%s1 + $0x4c] sm:$0xf]
      %v214 = vld [vmem:[%s1 + $0x50] sm:$0xf]
      %v215 = vld [vmem:[%s1 + $0x54] sm:$0xf]
      %v216 = vld [vmem:[%s1 + $0x58] sm:$0xf]
      %v217 = vld [vmem:[%s1 + $0x5c] sm:$0xf]
      %v218 = vld [vmem:[%s1 + $0x60] sm:$0xf]
      %v219 = vld [vmem:[%s1 + $0x64] sm:$0xf]
      %v220 = vld [vmem:[%s1 + $0x68] sm:$0xf]
      %v221 = vld [vmem:[%s1 + $0x6c] sm:$0xf]
      %v222 = vld [vmem:[%s1 + $0x70] sm:$0xf]
      %v223 = vld [vmem:[%s1 + $0x74] sm:$0xf]
      %v224 = vld [vmem:[%s1 + $0x78] sm:$0xf]
      %v225 = vld [vmem:[%s1 + $0x7c] sm:$0xf]
      %v226 = vld [vmem:[%s1 + $0x80] sm:$0xf]
      %v227 = vld [vmem:[%s1 + $0x84] sm:$0xf]
      %v228 = vld [vmem:[%s1 + $0x88] sm:$0xf]
      %v229 = vld [vmem:[%s1 + $0x8c] sm:$0xf]
      %v230 = vld [vmem:[%s1 + $0x90] sm:$0xf]
      %v231 = vld [vmem:[%s1 + $0x94] sm:$0xf]
      %v232 = vld [vmem:[%s1 + $0x98] sm:$0xf]
      %v233 = vld [vmem:[%s1 + $0x9c] sm:$0xf]
      %v234 = vld [vmem:[%s1 + $0xa0] sm:$0xf]
      %v235 = vld [vmem:[%s1 + $0xa4] sm:$0xf]
      %v236 = vld [vmem:[%s1 + $0xa8] sm:$0xf]
      %v237 = vld [vmem:[%s1 + $0xac] sm:$0xf]
      %v238 = vld [vmem:[%s1 + $0xb0] sm:$0xf]
      %v239 = vld [vmem:[%s1 + $0xb4] sm:$0xf]
      %v240 = vld [vmem:[%s1 + $0xb8] sm:$0xf]
      %v241 = vld [vmem:[%s1 + $0xbc] sm:$0xf]
      %v242 = vld [vmem:[%s1 + $0xc0] sm:$0xf]
      %v243 = vld [vmem:[%s1 + $0xc4] sm:$0xf]
      %v244 = vld [vmem:[%s1 + $0xc8] sm:$0xf]
      %v245 = vld [vmem:[%s1 + $0xcc] sm:$0xf]
      %v246 = vld [vmem:[%s1 + $0xd0] sm:$0xf]
      %v247 = vld [vmem:[%s1 + $0xd4] sm:$0xf]
      %v248 = vld [vmem:[%s1 + $0xd8] sm:$0xf]
      %v249 = vld [vmem:[%s1 + $0xdc] sm:$0xf]
      %v250 = vld [vmem:[%s1 + $0xe0] sm:$0xf]
      %v251 = vld [vmem:[%s1 + $0xe4] sm:$0xf]
      %v252 = vld [vmem:[%s1 + $0xe8] sm:$0xf]
      %v253 = vld [vmem:[%s1 + $0xec] sm:$0xf]
      %v254 = vld [vmem:[%s1 + $0xf0] sm:$0xf]
      %v255 = vld [vmem:[%s1 + $0xf4] sm:$0xf]
      %v256 = vld [vmem:[%s1 + $0xf8] sm:$0xf]
      %v257 = vld [vmem:[%s1 + $0xfc] sm:$0xf]
      %v258 = vld [vmem:[%s1 + $0x100] sm:$0xf]
      %v259 = vld [vmem:[%s1 + $0x104] sm:$0xf]
      %v260 = vld [vmem:[%s1 + $0x108] sm:$0xf]
      %v261 = vld [vmem:[%s1 + $0x10c] sm:$0xf]
      %v262 = vld [vmem:[%s1 + $0x110] sm:$0xf]
      %v263 = vld [vmem:[%s1 + $0x114] sm:$0xf]
      %v264 = vld [vmem:[%s1 + $0x118] sm:$0xf]
      %v265 = vld [vmem:[%s1 + $0x11c] sm:$0xf]
      %v266 = vld [vmem:[%s1 + $0x120] sm:$0xf]
      %v267 = vld [vmem:[%s1 + $0x124] sm:$0xf]
      %v268 = vld [vmem:[%s1 + $0x128] sm:$0xf]
      %v269 = vld [vmem:[%s1 + $0x12c] sm:$0xf]
      %v270 = vld [vmem:[%s1 + $0x130] sm:$0xf]
      %v271 = vld [vmem:[%s1 + $0x134] sm:$0xf]
      %v272 = vld [vmem:[%s1 + $0x138] sm:$0xf]
      %v273 = vld [vmem:[%s1 + $0x13c] sm:$0xf]
      %v274 = vld [vmem:[%s1 + $0x140] sm:$0xf]
      %v275 = vld [vmem:[%s1 + $0x144] sm:$0xf]
      %v276 = vld [vmem:[%s1 + $0x148] sm:$0xf]
      %v277 = vld [vmem:[%s1 + $0x14c] sm:$0xf]
      %v278 = vld [vmem:[%s1 + $0x150] sm:$0xf]
      %v279 = vld [vmem:[%s1 + $0x154] sm:$0xf]
      %v280 = vld [vmem:[%s1 + $0x158] sm:$0xf]
      %v281 = vld [vmem:[%s1 + $0x15c] sm:$0xf]
      %v282 = vld [vmem:[%s1 + $0x160] sm:$0xf]
      %v283 = vld [vmem:[%s1 + $0x164] sm:$0xf]
      %v284 = vld [vmem:[%s1 + $0x168] sm:$0xf]
      %v285 = vld [vmem:[%s1 + $0x16c] sm:$0xf]
      %v286 = vld [vmem:[%s1 + $0x170] sm:$0xf]
      %v287 = vld [vmem:[%s1 + $0x174] sm:$0xf]
      %v288 = vld [vmem:[%s1 + $0x178] sm:$0xf]
      %v289 = vld [vmem:[%s1 + $0x17c] sm:$0xf]
      %v290 = vld [vmem:[%s1 + $0x180] sm:$0xf]
      %v291 = vld [vmem:[%s1 + $0x184] sm:$0xf]
      %v292 = vld [vmem:[%s1 + $0x188] sm:$0xf]
      %v293 = vld [vmem:[%s1 + $0x18c] sm:$0xf]
      %v294 = vld [vmem:[%s1 + $0x190] sm:$0xf]
      %v295 = vld [vmem:[%s1 + $0x194] sm:$0xf]
      %v296 = vld [vmem:[%s1 + $0x198] sm:$0xf]
      %v297 = vld [vmem:[%s1 + $0x19c] sm:$0xf]
      %v298 = vld [vmem:[%s1 + $0x1a0] sm:$0xf]
      %v299 = vld [vmem:[%s1 + $0x1a4] sm:$0xf]
      %v300 = vld [vmem:[%s1 + $0x1a8] sm:$0xf]
      %v301 = vld [vmem:[%s1 + $0x1ac] sm:$0xf]
      %v302 = vld [vmem:[%s1 + $0x1b0] sm:$0xf]
      %v303 = vld [vmem:[%s1 + $0x1b4] sm:$0xf]
      %v304 = vld [vmem:[%s1 + $0x1b8] sm:$0xf]
      %v305 = vld [vmem:[%s1 + $0x1bc] sm:$0xf]
      %v306 = vld [vmem:[%s1 + $0x1c0] sm:$0xf]
      %v307 = vld [vmem:[%s1 + $0x1c4] sm:$0xf]
      %v308 = vld [vmem:[%s1 + $0x1c8] sm:$0xf]
      %v309 = vld [vmem:[%s1 + $0x1cc] sm:$0xf]
      %v310 = vld [vmem:[%s1 + $0x1d0] sm:$0xf]
      %v311 = vld [vmem:[%s1 + $0x1d4] sm:$0xf]
      %v312 = vld [vmem:[%s1 + $0x1d8] sm:$0xf]
      %v313 = vld [vmem:[%s1 + $0x1dc] sm:$0xf]
      %v314 = vld [vmem:[%s1 + $0x1e0] sm:$0xf]
      %v315 = vld [vmem:[%s1 + $0x1e4] sm:$0xf]
      %v316 = vld [vmem:[%s1 + $0x1e8] sm:$0xf]
      %v317 = vld [vmem:[%s1 + $0x1ec] sm:$0xf]
      %v318 = vld [vmem:[%s1 + $0x1f0] sm:$0xf]
      %v319 = vld [vmem:[%s1 + $0x1f4] sm:$0xf]
      %v320 = vld [vmem:[%s1 + $0x1f8] sm:$0xf]
      %v321 = vld [vmem:[%s1 + $0x1fc] sm:$0xf]
      %v322 = vld [vmem:[%s2] sm:$0x1]
      %v324 = vlaneseq
      %v325 = vshrl.u32 %v324, 7
      %v326 = vsub.s32 0, %v325
      %v327 = vrot.slane %v322, %v326
      %v337 = vunpack.c.l.b16 %v186
      %v338 = vunpack.c.h.b16 %v186
      %v339 = vunpack.c.l.b16 %v187
      %v340 = vunpack.c.h.b16 %v187
      %v341 = vunpack.c.l.b16 %v188
      %v342 = vunpack.c.h.b16 %v188
      %v343 = vunpack.c.l.b16 %v189
      %v344 = vunpack.c.h.b16 %v189
      %v345 = vunpack.c.l.b16 %v190
      %v346 = vunpack.c.h.b16 %v190
      %v347 = vunpack.c.l.b16 %v191
      %v348 = vunpack.c.h.b16 %v191
      %v349 = vunpack.c.l.b16 %v192
      %v350 = vunpack.c.h.b16 %v192
      %v351 = vunpack.c.l.b16 %v193
      %v352 = vunpack.c.h.b16 %v193
      %v353 = vpack.c.b16 %v345, %v337
      %v354 = vpack.c.b16 %v346, %v338
      %v355 = vpack.c.b16 %v347, %v339
      %v356 = vpack.c.b16 %v348, %v340
      %v357 = vpack.c.b16 %v349, %v341
      %v358 = vpack.c.b16 %v350, %v342
      %v359 = vpack.c.b16 %v351, %v343
      %v360 = vpack.c.b16 %v352, %v344
      %v497 = vunpack.c.l.b16 %v194
      %v498 = vunpack.c.l.b16 %v195
      %v499 = vunpack.c.l.b16 %v196
      %v500 = vunpack.c.l.b16 %v197
      %v501 = vunpack.c.l.b16 %v198
      %v502 = vunpack.c.l.b16 %v199
      %v503 = vunpack.c.l.b16 %v200
      %v504 = vunpack.c.l.b16 %v201
      %v505 = vunpack.c.l.b16 %v202
      %v506 = vunpack.c.l.b16 %v203
      %v507 = vunpack.c.l.b16 %v204
      %v508 = vunpack.c.l.b16 %v205
      %v509 = vunpack.c.l.b16 %v206
      %v510 = vunpack.c.l.b16 %v207
      %v511 = vunpack.c.l.b16 %v208
      %v512 = vunpack.c.l.b16 %v209
      %v513 = vunpack.c.l.b16 %v210
      %v514 = vunpack.c.l.b16 %v211
      %v515 = vunpack.c.l.b16 %v212
      %v516 = vunpack.c.l.b16 %v213
      %v517 = vunpack.c.l.b16 %v214
      %v518 = vunpack.c.l.b16 %v215
      %v519 = vunpack.c.l.b16 %v216
      %v520 = vunpack.c.l.b16 %v217
      %v521 = vunpack.c.l.b16 %v218
      %v522 = vunpack.c.l.b16 %v219
      %v523 = vunpack.c.l.b16 %v220
      %v524 = vunpack.c.l.b16 %v221
      %v525 = vunpack.c.l.b16 %v222
      %v526 = vunpack.c.l.b16 %v223
      %v527 = vunpack.c.l.b16 %v224
      %v528 = vunpack.c.l.b16 %v225
      %v529 = vunpack.c.l.b16 %v226
      %v530 = vunpack.c.l.b16 %v227
      %v531 = vunpack.c.l.b16 %v228
      %v532 = vunpack.c.l.b16 %v229
      %v533 = vunpack.c.l.b16 %v230
      %v534 = vunpack.c.l.b16 %v231
      %v535 = vunpack.c.l.b16 %v232
      %v536 = vunpack.c.l.b16 %v233
      %v537 = vunpack.c.l.b16 %v234
      %v538 = vunpack.c.l.b16 %v235
      %v539 = vunpack.c.l.b16 %v236
      %v540 = vunpack.c.l.b16 %v237
      %v541 = vunpack.c.l.b16 %v238
      %v542 = vunpack.c.l.b16 %v239
      %v543 = vunpack.c.l.b16 %v240
      %v544 = vunpack.c.l.b16 %v241
      %v545 = vunpack.c.l.b16 %v242
      %v546 = vunpack.c.l.b16 %v243
      %v547 = vunpack.c.l.b16 %v244
      %v548 = vunpack.c.l.b16 %v245
      %v549 = vunpack.c.l.b16 %v246
      %v550 = vunpack.c.l.b16 %v247
      %v551 = vunpack.c.l.b16 %v248
      %v552 = vunpack.c.l.b16 %v249
      %v553 = vunpack.c.l.b16 %v250
      %v554 = vunpack.c.l.b16 %v251
      %v555 = vunpack.c.l.b16 %v252
      %v556 = vunpack.c.l.b16 %v253
      %v557 = vunpack.c.l.b16 %v254
      %v558 = vunpack.c.l.b16 %v255
      %v559 = vunpack.c.l.b16 %v256
      %v560 = vunpack.c.l.b16 %v257
      %v561 = vunpack.c.l.b16 %v258
      %v562 = vunpack.c.l.b16 %v259
      %v563 = vunpack.c.l.b16 %v260
      %v564 = vunpack.c.l.b16 %v261
      %v565 = vunpack.c.l.b16 %v262
      %v566 = vunpack.c.l.b16 %v263
      %v567 = vunpack.c.l.b16 %v264
      %v568 = vunpack.c.l.b16 %v265
      %v569 = vunpack.c.l.b16 %v266
      %v570 = vunpack.c.l.b16 %v267
      %v571 = vunpack.c.l.b16 %v268
      %v572 = vunpack.c.l.b16 %v269
      %v573 = vunpack.c.l.b16 %v270
      %v574 = vunpack.c.l.b16 %v271
      %v575 = vunpack.c.l.b16 %v272
      %v576 = vunpack.c.l.b16 %v273
      %v577 = vunpack.c.l.b16 %v274
      %v578 = vunpack.c.l.b16 %v275
      %v579 = vunpack.c.l.b16 %v276
      %v580 = vunpack.c.l.b16 %v277
      %v581 = vunpack.c.l.b16 %v278
      %v582 = vunpack.c.l.b16 %v279
      %v583 = vunpack.c.l.b16 %v280
      %v584 = vunpack.c.l.b16 %v281
      %v585 = vunpack.c.l.b16 %v282
      %v586 = vunpack.c.l.b16 %v283
      %v587 = vunpack.c.l.b16 %v284
      %v588 = vunpack.c.l.b16 %v285
      %v589 = vunpack.c.l.b16 %v286
      %v590 = vunpack.c.l.b16 %v287
      %v591 = vunpack.c.l.b16 %v288
      %v592 = vunpack.c.l.b16 %v289
      %v593 = vunpack.c.l.b16 %v290
      %v594 = vunpack.c.l.b16 %v291
      %v595 = vunpack.c.l.b16 %v292
      %v596 = vunpack.c.l.b16 %v293
      %v597 = vunpack.c.l.b16 %v294
      %v598 = vunpack.c.l.b16 %v295
      %v599 = vunpack.c.l.b16 %v296
      %v600 = vunpack.c.l.b16 %v297
      %v601 = vunpack.c.l.b16 %v298
      %v602 = vunpack.c.l.b16 %v299
      %v603 = vunpack.c.l.b16 %v300
      %v604 = vunpack.c.l.b16 %v301
      %v605 = vunpack.c.l.b16 %v302
      %v606 = vunpack.c.l.b16 %v303
      %v607 = vunpack.c.l.b16 %v304
      %v608 = vunpack.c.l.b16 %v305
      %v609 = vunpack.c.l.b16 %v306
      %v610 = vunpack.c.l.b16 %v307
      %v611 = vunpack.c.l.b16 %v308
      %v612 = vunpack.c.l.b16 %v309
      %v613 = vunpack.c.l.b16 %v310
      %v614 = vunpack.c.l.b16 %v311
      %v615 = vunpack.c.l.b16 %v312
      %v616 = vunpack.c.l.b16 %v313
      %v617 = vunpack.c.l.b16 %v314
      %v618 = vunpack.c.l.b16 %v315
      %v619 = vunpack.c.l.b16 %v316
      %v620 = vunpack.c.l.b16 %v317
      %v621 = vunpack.c.l.b16 %v318
      %v622 = vunpack.c.l.b16 %v319
      %v623 = vunpack.c.l.b16 %v320
      %v624 = vunpack.c.l.b16 %v321
      %v625 = vpack.c.b16 %v498, %v497
      %v626 = vpack.c.b16 %v500, %v499
      %v627 = vpack.c.b16 %v502, %v501
      %v628 = vpack.c.b16 %v504, %v503
      %v629 = vpack.c.b16 %v506, %v505
      %v630 = vpack.c.b16 %v508, %v507
      %v631 = vpack.c.b16 %v510, %v509
      %v632 = vpack.c.b16 %v512, %v511
      %v633 = vpack.c.b16 %v514, %v513
      %v634 = vpack.c.b16 %v516, %v515
      %v635 = vpack.c.b16 %v518, %v517
      %v636 = vpack.c.b16 %v520, %v519
      %v637 = vpack.c.b16 %v522, %v521
      %v638 = vpack.c.b16 %v524, %v523
      %v639 = vpack.c.b16 %v526, %v525
      %v640 = vpack.c.b16 %v528, %v527
      %v641 = vpack.c.b16 %v530, %v529
      %v642 = vpack.c.b16 %v532, %v531
      %v643 = vpack.c.b16 %v534, %v533
      %v644 = vpack.c.b16 %v536, %v535
      %v645 = vpack.c.b16 %v538, %v537
      %v646 = vpack.c.b16 %v540, %v539
      %v647 = vpack.c.b16 %v542, %v541
      %v648 = vpack.c.b16 %v544, %v543
      %v649 = vpack.c.b16 %v546, %v545
      %v650 = vpack.c.b16 %v548, %v547
      %v651 = vpack.c.b16 %v550, %v549
      %v652 = vpack.c.b16 %v552, %v551
      %v653 = vpack.c.b16 %v554, %v553
      %v654 = vpack.c.b16 %v556, %v555
      %v655 = vpack.c.b16 %v558, %v557
      %v656 = vpack.c.b16 %v560, %v559
      %v657 = vpack.c.b16 %v562, %v561
      %v658 = vpack.c.b16 %v564, %v563
      %v659 = vpack.c.b16 %v566, %v565
      %v660 = vpack.c.b16 %v568, %v567
      %v661 = vpack.c.b16 %v570, %v569
      %v662 = vpack.c.b16 %v572, %v571
      %v663 = vpack.c.b16 %v574, %v573
      %v664 = vpack.c.b16 %v576, %v575
      %v665 = vpack.c.b16 %v578, %v577
      %v666 = vpack.c.b16 %v580, %v579
      %v667 = vpack.c.b16 %v582, %v581
      %v668 = vpack.c.b16 %v584, %v583
      %v669 = vpack.c.b16 %v586, %v585
      %v670 = vpack.c.b16 %v588, %v587
      %v671 = vpack.c.b16 %v590, %v589
      %v672 = vpack.c.b16 %v592, %v591
      %v673 = vpack.c.b16 %v594, %v593
      %v674 = vpack.c.b16 %v596, %v595
      %v675 = vpack.c.b16 %v598, %v597
      %v676 = vpack.c.b16 %v600, %v599
      %v677 = vpack.c.b16 %v602, %v601
      %v678 = vpack.c.b16 %v604, %v603
      %v679 = vpack.c.b16 %v606, %v605
      %v680 = vpack.c.b16 %v608, %v607
      %v681 = vpack.c.b16 %v610, %v609
      %v682 = vpack.c.b16 %v612, %v611
      %v683 = vpack.c.b16 %v614, %v613
      %v684 = vpack.c.b16 %v616, %v615
      %v685 = vpack.c.b16 %v618, %v617
      %v686 = vpack.c.b16 %v620, %v619
      %v687 = vpack.c.b16 %v622, %v621
      %v688 = vpack.c.b16 %v624, %v623
      %753 = vmatprep.subr.bf16.mxu0 0
      %754 = vmatpush1.bf16.msra.mxu0 %v625
      %755 = vmatprep.subr.bf16.mxu0 0
      %756 = vmatpush1.bf16.msra.mxu0 %v626
      %757 = vmatprep.subr.bf16.mxu0 0
      %758 = vmatpush1.bf16.msra.mxu0 %v627
      %759 = vmatprep.subr.bf16.mxu0 0
      %760 = vmatpush1.bf16.msra.mxu0 %v628
      %761 = vmatprep.subr.bf16.mxu0 0
      %762 = vmatpush1.bf16.msra.mxu0 %v629
      %763 = vmatprep.subr.bf16.mxu0 0
      %764 = vmatpush1.bf16.msra.mxu0 %v630
      %765 = vmatprep.subr.bf16.mxu0 0
      %766 = vmatpush1.bf16.msra.mxu0 %v631
      %767 = vmatprep.subr.bf16.mxu0 0
      %768 = vmatpush1.bf16.msra.mxu0 %v632
      %769 = vmatprep.subr.bf16.mxu0 0
      %770 = vmatpush1.bf16.msra.mxu0 %v633
      %771 = vmatprep.subr.bf16.mxu0 0
      %772 = vmatpush1.bf16.msra.mxu0 %v634
      %773 = vmatprep.subr.bf16.mxu0 0
      %774 = vmatpush1.bf16.msra.mxu0 %v635
      %775 = vmatprep.subr.bf16.mxu0 0
      %776 = vmatpush1.bf16.msra.mxu0 %v636
      %777 = vmatprep.subr.bf16.mxu0 0
      %778 = vmatpush1.bf16.msra.mxu0 %v637
      %779 = vmatprep.subr.bf16.mxu0 0
      %780 = vmatpush1.bf16.msra.mxu0 %v638
      %781 = vmatprep.subr.bf16.mxu0 0
      %782 = vmatpush1.bf16.msra.mxu0 %v639
      %783 = vmatprep.subr.bf16.mxu0 0
      %784 = vmatpush1.bf16.msra.mxu0 %v640
      %785 = vmatprep.mubr.bf16.mxu0 %v354
      %786 = vmatmul.mubr.bf16.gmra.mrb[0].mxu0 %v353
      %v787 = vpop.f32.mrb[0].mxu0
      %v788 = vadd.f32 %v327, %v787
      %v789 = vpop.f32.mrb[0].mxu0
      %v790 = vpop.f32.mrb[0].mxu0
      %v791 = vadd.f32 %v327, %v790
      %v792 = vpop.f32.mrb[0].mxu0
      %793 = vdwg.mxu0
      %794 = vmatprep.subr.bf16.mxu0 0
      %795 = vmatpush1.bf16.msra.mxu0 %v641
      %796 = vmatprep.subr.bf16.mxu0 0
      %797 = vmatpush1.bf16.msra.mxu0 %v642
      %798 = vmatprep.subr.bf16.mxu0 0
      %799 = vmatpush1.bf16.msra.mxu0 %v643
      %800 = vmatprep.subr.bf16.mxu0 0
      %801 = vmatpush1.bf16.msra.mxu0 %v644
      %802 = vmatprep.subr.bf16.mxu0 0
      %803 = vmatpush1.bf16.msra.mxu0 %v645
      %804 = vmatprep.subr.bf16.mxu0 0
      %805 = vmatpush1.bf16.msra.mxu0 %v646
      %806 = vmatprep.subr.bf16.mxu0 0
      %807 = vmatpush1.bf16.msra.mxu0 %v647
      %808 = vmatprep.subr.bf16.mxu0 0
      %809 = vmatpush1.bf16.msra.mxu0 %v648
      %810 = vmatprep.subr.bf16.mxu0 0
      %811 = vmatpush1.bf16.msra.mxu0 %v649
      %812 = vmatprep.subr.bf16.mxu0 0
      %813 = vmatpush1.bf16.msra.mxu0 %v650
      %814 = vmatprep.subr.bf16.mxu0 0
      %815 = vmatpush1.bf16.msra.mxu0 %v651
      %816 = vmatprep.subr.bf16.mxu0 0
      %817 = vmatpush1.bf16.msra.mxu0 %v652
      %818 = vmatprep.subr.bf16.mxu0 0
      %819 = vmatpush1.bf16.msra.mxu0 %v653
      %820 = vmatprep.subr.bf16.mxu0 0
      %821 = vmatpush1.bf16.msra.mxu0 %v654
      %822 = vmatprep.subr.bf16.mxu0 0
      %823 = vmatpush1.bf16.msra.mxu0 %v655
      %824 = vmatprep.subr.bf16.mxu0 0
      %825 = vmatpush1.bf16.msra.mxu0 %v656
      %826 = vmatprep.mubr.bf16.mxu0 %v356
      %827 = vmatmul.mubr.bf16.gmra.mrb[0].mxu0 %v355
      %v828 = vpop.f32.mrb[0].mxu0
      %v829 = vadd.f32 %v788, %v828
      %v830 = vpop.f32.mrb[0].mxu0
      %v831 = vpop.f32.mrb[0].mxu0
      %v832 = vadd.f32 %v791, %v831
      %v833 = vpop.f32.mrb[0].mxu0
      %834 = vdwg.mxu0
      %835 = vmatprep.subr.bf16.mxu0 0
      %836 = vmatpush1.bf16.msra.mxu0 %v657
      %837 = vmatprep.subr.bf16.mxu0 0
      %838 = vmatpush1.bf16.msra.mxu0 %v658
      %839 = vmatprep.subr.bf16.mxu0 0
      %840 = vmatpush1.bf16.msra.mxu0 %v659
      %841 = vmatprep.subr.bf16.mxu0 0
      %842 = vmatpush1.bf16.msra.mxu0 %v660
      %843 = vmatprep.subr.bf16.mxu0 0
      %844 = vmatpush1.bf16.msra.mxu0 %v661
      %845 = vmatprep.subr.bf16.mxu0 0
      %846 = vmatpush1.bf16.msra.mxu0 %v662
      %847 = vmatprep.subr.bf16.mxu0 0
      %848 = vmatpush1.bf16.msra.mxu0 %v663
      %849 = vmatprep.subr.bf16.mxu0 0
      %850 = vmatpush1.bf16.msra.mxu0 %v664
      %851 = vmatprep.subr.bf16.mxu0 0
      %852 = vmatpush1.bf16.msra.mxu0 %v665
      %853 = vmatprep.subr.bf16.mxu0 0
      %854 = vmatpush1.bf16.msra.mxu0 %v666
      %855 = vmatprep.subr.bf16.mxu0 0
      %856 = vmatpush1.bf16.msra.mxu0 %v667
      %857 = vmatprep.subr.bf16.mxu0 0
      %858 = vmatpush1.bf16.msra.mxu0 %v668
      %859 = vmatprep.subr.bf16.mxu0 0
      %860 = vmatpush1.bf16.msra.mxu0 %v669
      %861 = vmatprep.subr.bf16.mxu0 0
      %862 = vmatpush1.bf16.msra.mxu0 %v670
      %863 = vmatprep.subr.bf16.mxu0 0
      %864 = vmatpush1.bf16.msra.mxu0 %v671
      %865 = vmatprep.subr.bf16.mxu0 0
      %866 = vmatpush1.bf16.msra.mxu0 %v672
      %867 = vmatprep.mubr.bf16.mxu0 %v358
      %868 = vmatmul.mubr.bf16.gmra.mrb[0].mxu0 %v357
      %v869 = vpop.f32.mrb[0].mxu0
      %v870 = vadd.f32 %v829, %v869
      %v871 = vpop.f32.mrb[0].mxu0
      %v872 = vpop.f32.mrb[0].mxu0
      %v873 = vadd.f32 %v832, %v872
      %v874 = vpop.f32.mrb[0].mxu0
      %875 = vdwg.mxu0
      %876 = vmatprep.subr.bf16.mxu0 0
      %877 = vmatpush1.bf16.msra.mxu0 %v673
      %878 = vmatprep.subr.bf16.mxu0 0
      %879 = vmatpush1.bf16.msra.mxu0 %v674
      %880 = vmatprep.subr.bf16.mxu0 0
      %881 = vmatpush1.bf16.msra.mxu0 %v675
      %882 = vmatprep.subr.bf16.mxu0 0
      %883 = vmatpush1.bf16.msra.mxu0 %v676
      %884 = vmatprep.subr.bf16.mxu0 0
      %885 = vmatpush1.bf16.msra.mxu0 %v677
      %886 = vmatprep.subr.bf16.mxu0 0
      %887 = vmatpush1.bf16.msra.mxu0 %v678
      %888 = vmatprep.subr.bf16.mxu0 0
      %889 = vmatpush1.bf16.msra.mxu0 %v679
      %890 = vmatprep.subr.bf16.mxu0 0
      %891 = vmatpush1.bf16.msra.mxu0 %v680
      %892 = vmatprep.subr.bf16.mxu0 0
      %893 = vmatpush1.bf16.msra.mxu0 %v681
      %894 = vmatprep.subr.bf16.mxu0 0
      %895 = vmatpush1.bf16.msra.mxu0 %v682
      %896 = vmatprep.subr.bf16.mxu0 0
      %897 = vmatpush1.bf16.msra.mxu0 %v683
      %898 = vmatprep.subr.bf16.mxu0 0
      %899 = vmatpush1.bf16.msra.mxu0 %v684
      %900 = vmatprep.subr.bf16.mxu0 0
      %901 = vmatpush1.bf16.msra.mxu0 %v685
      %902 = vmatprep.subr.bf16.mxu0 0
      %903 = vmatpush1.bf16.msra.mxu0 %v686
      %904 = vmatprep.subr.bf16.mxu0 0
      %905 = vmatpush1.bf16.msra.mxu0 %v687
      %906 = vmatprep.subr.bf16.mxu0 0
      %907 = vmatpush1.bf16.msra.mxu0 %v688
      %908 = vmatprep.mubr.bf16.mxu0 %v360
      %909 = vmatmul.mubr.bf16.gmra.mrb[0].mxu0 %v359
      %v910 = vpop.f32.mrb[0].mxu0
      %v911 = vadd.f32 %v870, %v910
      %v912 = vpop.f32.mrb[0].mxu0
      %v913 = vpop.f32.mrb[0].mxu0
      %v914 = vadd.f32 %v873, %v913
      %v915 = vpop.f32.mrb[0].mxu0
      %916 = vdwg.mxu0
      %v917 = vpack.c.bf16 %v914, %v911
      %v919 = vunpack.c.l.b16 %v917
      %v920 = vunpack.c.h.b16 %v917
      %v921 = vpack.c.b16 %v919, %v919
      %v922 = vpack.c.b16 %v920, %v920
      %925 = vst [vmem:[%s175] sm:$0xf] %v921
      %926 = vst [vmem:[%s175 + $0x4] sm:$0xf] %v922
      %s927 = smul.u32 2, %s14
      %p928 = scmp.lt.s32.totalorder %s927, 3
      %s929 = scalar_select %p928, %s927, 3
      %s930 = smul.addr %s929, 4
      %s931 = scalar_lea.vmem %s3, %s930
      // Predicated region
      $region33: #{cnn_forward.4} parent=31 // pred_check
        %p932 = pneg %p100
      $region34: #{cnn_forward.4} parent=31 // pred_check_branch
        %934 = sbr.rel (%p932) target = $region36
      $region35: #{cnn_forward.4} parent=31 // pred_region
        %s935 = smul.u32 2, %s14
      $region36: #{cnn_forward.4} parent=31 // pred_fallthru
        _
    $region32: #{cnn_forward.4} parent=5 // pred_fallthru
      _
    %p936 = scmp.le.s32.totalorder 2, %s9
    // Predicated region
    $region37: #{cnn_forward.4} parent=5 // pred_check
      %p937 = pneg %p936
    $region38: #{cnn_forward.4} parent=5 // pred_check_branch
      %939 = sbr.rel (%p937) target = $region40
    $region39: #{cnn_forward.4} parent=5 // pred_region
      %s940 = ssub.s32 %s9, 2
      // Predicated region
      $region41: #{cnn_forward.4} parent=39 // pred_check
        %p941 = pneg %p106
      $region42: #{cnn_forward.4} parent=39 // pred_check_branch
        %943 = sbr.rel (%p941) target = $region44
      $region43: #{cnn_forward.4} parent=39 // pred_region
        %s944 = smul.u32 2, %s15
        %p945 = scmp.lt.s32.totalorder %s944, 3
        %s946 = scalar_select %p945, %s944, 3
        %s947 = smul.addr %s946, 4
        %s948 = scalar_lea.vmem %s3, %s947
      $region44: #{cnn_forward.4} parent=39 // pred_fallthru
        _
    $region40: #{cnn_forward.4} parent=5 // pred_fallthru
      _
  $region6: #{cnn_forward.4} parent=0 // loop_footer
    %s13 = sadd.s32 1, %s9
  $region7: #{cnn_forward.4} parent=0 // loop_footer_branch
    %8 = sbr.rel target = $region3
  $region8: #{cnn_forward.4} parent=0 // loop_exit
    _

// kernel: cnn_forward.5
$region0: #{cnn_forward.5}
  #allocation0 [shape = 'u32[]', space=smem, size = 0x4, offset = 0x4, fixed_abs, tag = 'smem constant byte address 0x4 - core index']
  #allocation1 [shape = 'u32[144,128]{1,0:T(1,128)}', space=vmem, size = 0x12000, scoped, tag = 'internal scratch']
  %s0 = inlined_call_operand.vmem [shape: bf16[2,1568], index: 0, kind: input, shape index: {}]
  %s1 = inlined_call_operand.vmem [shape: bf16[1568,128], index: 1, kind: input, shape index: {}]
  %s2 = inlined_call_operand.vmem [shape: f32[1,128], index: 2, kind: input, shape index: {}]
  %s3 = inlined_call_operand.vmem [shape: bf16[128,128], index: 3, kind: input, shape index: {}]
  %s4 = inlined_call_operand.vmem [shape: f32[1,128], index: 4, kind: input, shape index: {}]
  %s5 = inlined_call_operand.hbm [shape: f32[2,128], index: 5, kind: output, shape index: {0}]
  %s6 = inlined_call_operand.hbm [shape: f32[2,128], index: 6, kind: output, shape index: {1}]
  %s7 = inlined_call_operand.hbm [shape: f32[2,128], index: 7, kind: output, shape index: {2}]
  %8 = xla_tuple %s5, %s6, %s7
  %s9 = sld [smem:[#allocation0]]
  $region46: #{cnn_forward.5} parent=0
    _
  %s11 = ssub.s32 1, %s9
  %s12 = scalar_select 0, %s11, %s9
  $region1: #{cnn_forward.5} parent=0
    #allocation2 [shape = 'u8[1024]{0}', space=vmem, size = 0x400, scoped, tag = 'output window, operand 0, single buffered']
    #allocation3 [shape = 's32[1]{0}', space=sflag, size = 0x4, scoped, tag = 'scoped memory for cnn_forward.5']
    #allocation4 [shape = 'u8[1024]{0}', space=vmem, size = 0x400, scoped, tag = 'output window, operand 1, single buffered']
    #allocation5 [shape = 's32[1]{0}', space=sflag, size = 0x4, scoped, tag = 'scoped memory for cnn_forward.5']
    #allocation6 [shape = 'u8[1024]{0}', space=vmem, size = 0x400, scoped, tag = 'output window, operand 2, single buffered']
    %13 = vsyncpa [#allocation3], 0
    %14 = vsyncpa [#allocation5], 0
    // Predicated region
    $region2: #{cnn_forward.5} parent=1 // pred_check
      _
    $region3: #{cnn_forward.5} parent=1 // pred_check_branch
      %16 = sbr.rel (0) target = $region5
    $region4: #{cnn_forward.5} parent=1 // pred_region
      _
    $region5: #{cnn_forward.5} parent=1 // pred_fallthru
      _
    // Predicated region
    $region6: #{cnn_forward.5} parent=1 // pred_check
      _
    $region7: #{cnn_forward.5} parent=1 // pred_check_branch
      %18 = sbr.rel (0) target = $region9
    $region8: #{cnn_forward.5} parent=1 // pred_region
      _
    $region9: #{cnn_forward.5} parent=1 // pred_fallthru
      _
    // Predicated region
    $region10: #{cnn_forward.5} parent=1 // pred_check
      _
    $region11: #{cnn_forward.5} parent=1 // pred_check_branch
      %20 = sbr.rel (0) target = $region13
    $region12: #{cnn_forward.5} parent=1 // pred_region
      _
    $region13: #{cnn_forward.5} parent=1 // pred_fallthru
      _
    // Predicated region
    $region14: #{cnn_forward.5} parent=1 // pred_check
      _
    $region15: #{cnn_forward.5} parent=1 // pred_check_branch
      %22 = sbr.rel (0) target = $region17
    $region16: #{cnn_forward.5} parent=1 // pred_region
      _
    $region17: #{cnn_forward.5} parent=1 // pred_fallthru
      _
    // Predicated region
    $region18: #{cnn_forward.5} parent=1 // pred_check
      _
    $region19: #{cnn_forward.5} parent=1 // pred_check_branch
      %24 = sbr.rel (0) target = $region21
    $region20: #{cnn_forward.5} parent=1 // pred_region
      _
    $region21: #{cnn_forward.5} parent=1 // pred_fallthru
      _
    %v26 = vld [vmem:[%s0] sm:$0xff]
    %v27 = vld [vmem:[%s0 + $0x8] sm:$0x1f]
    %v28 = vmax.bf16 %v26, 0
    %v29 = vmax.bf16 %v27, 0
    %v30 = vld [vmem:[%s1] sm:$0xf]
    %v31 = vld [vmem:[%s1 + $0x4] sm:$0xf]
    %v32 = vld [vmem:[%s1 + $0x8] sm:$0xf]
    %v33 = vld [vmem:[%s1 + $0xc] sm:$0xf]
    %v34 = vld [vmem:[%s1 + $0x10] sm:$0xf]
    %v35 = vld [vmem:[%s1 + $0x14] sm:$0xf]
    %v36 = vld [vmem:[%s1 + $0x18] sm:$0xf]
    %v37 = vld [vmem:[%s1 + $0x1c] sm:$0xf]
    %v38 = vld [vmem:[%s1 + $0x20] sm:$0xf]
    %v39 = vld [vmem:[%s1 + $0x24] sm:$0xf]
    %v40 = vld [vmem:[%s1 + $0x28] sm:$0xf]
    %v41 = vld [vmem:[%s1 + $0x2c] sm:$0xf]
    %v42 = vld [vmem:[%s1 + $0x30] sm:$0xf]
    %v43 = vld [vmem:[%s1 + $0x34] sm:$0xf]
    %v44 = vld [vmem:[%s1 + $0x38] sm:$0xf]
    %v45 = vld [vmem:[%s1 + $0x3c] sm:$0xf]
    %v46 = vld [vmem:[%s1 + $0x40] sm:$0xf]
    %v47 = vld [vmem:[%s1 + $0x44] sm:$0xf]
    %v48 = vld [vmem:[%s1 + $0x48] sm:$0xf]
    %v49 = vld [vmem:[%s1 + $0x4c] sm:$0xf]
    %v50 = vld [vmem:[%s1 + $0x50] sm:$0xf]
    %v51 = vld [vmem:[%s1 + $0x54] sm:$0xf]
    %v52 = vld [vmem:[%s1 + $0x58] sm:$0xf]
    %v53 = vld [vmem:[%s1 + $0x5c] sm:$0xf]
    %v54 = vld [vmem:[%s1 + $0x60] sm:$0xf]
    %v55 = vld [vmem:[%s1 + $0x64] sm:$0xf]
    %v56 = vld [vmem:[%s1 + $0x68] sm:$0xf]
    %v57 = vld [vmem:[%s1 + $0x6c] sm:$0xf]
    %v58 = vld [vmem:[%s1 + $0x70] sm:$0xf]
    %v59 = vld [vmem:[%s1 + $0x74] sm:$0xf]
    %v60 = vld [vmem:[%s1 + $0x78] sm:$0xf]
    %v61 = vld [vmem:[%s1 + $0x7c] sm:$0xf]
    %v62 = vld [vmem:[%s1 + $0x80] sm:$0xf]
    %v63 = vld [vmem:[%s1 + $0x84] sm:$0xf]
    %v64 = vld [vmem:[%s1 + $0x88] sm:$0xf]
    %v65 = vld [vmem:[%s1 + $0x8c] sm:$0xf]
    %v66 = vld [vmem:[%s1 + $0x90] sm:$0xf]
    %v67 = vld [vmem:[%s1 + $0x94] sm:$0xf]
    %v68 = vld [vmem:[%s1 + $0x98] sm:$0xf]
    %v69 = vld [vmem:[%s1 + $0x9c] sm:$0xf]
    %v70 = vld [vmem:[%s1 + $0xa0] sm:$0xf]
    %v71 = vld [vmem:[%s1 + $0xa4] sm:$0xf]
    %v72 = vld [vmem:[%s1 + $0xa8] sm:$0xf]
    %v73 = vld [vmem:[%s1 + $0xac] sm:$0xf]
    %v74 = vld [vmem:[%s1 + $0xb0] sm:$0xf]
    %v75 = vld [vmem:[%s1 + $0xb4] sm:$0xf]
    %v76 = vld [vmem:[%s1 + $0xb8] sm:$0xf]
    %v77 = vld [vmem:[%s1 + $0xbc] sm:$0xf]
    %v78 = vld [vmem:[%s1 + $0xc0] sm:$0xf]
    %v79 = vld [vmem:[%s1 + $0xc4] sm:$0xf]
    %v80 = vld [vmem:[%s1 + $0xc8] sm:$0xf]
    %v81 = vld [vmem:[%s1 + $0xcc] sm:$0xf]
    %v82 = vld [vmem:[%s1 + $0xd0] sm:$0xf]
    %v83 = vld [vmem:[%s1 + $0xd4] sm:$0xf]
    %v84 = vld [vmem:[%s1 + $0xd8] sm:$0xf]
    %v85 = vld [vmem:[%s1 + $0xdc] sm:$0xf]
    %v86 = vld [vmem:[%s1 + $0xe0] sm:$0xf]
    %v87 = vld [vmem:[%s1 + $0xe4] sm:$0xf]
    %v88 = vld [vmem:[%s1 + $0xe8] sm:$0xf]
    %v89 = vld [vmem:[%s1 + $0xec] sm:$0xf]
    %v90 = vld [vmem:[%s1 + $0xf0] sm:$0xf]
    %v91 = vld [vmem:[%s1 + $0xf4] sm:$0xf]
    %v92 = vld [vmem:[%s1 + $0xf8] sm:$0xf]
    %v93 = vld [vmem:[%s1 + $0xfc] sm:$0xf]
    %v94 = vld [vmem:[%s1 + $0x100] sm:$0xf]
    %v95 = vld [vmem:[%s1 + $0x104] sm:$0xf]
    %v96 = vld [vmem:[%s1 + $0x108] sm:$0xf]
    %v97 = vld [vmem:[%s1 + $0x10c] sm:$0xf]
    %v98 = vld [vmem:[%s1 + $0x110] sm:$0xf]
    %v99 = vld [vmem:[%s1 + $0x114] sm:$0xf]
    %v100 = vld [vmem:[%s1 + $0x118] sm:$0xf]
    %v101 = vld [vmem:[%s1 + $0x11c] sm:$0xf]
    %v102 = vld [vmem:[%s1 + $0x120] sm:$0xf]
    %v103 = vld [vmem:[%s1 + $0x124] sm:$0xf]
    %v104 = vld [vmem:[%s1 + $0x128] sm:$0xf]
    %v105 = vld [vmem:[%s1 + $0x12c] sm:$0xf]
    %v106 = vld [vmem:[%s1 + $0x130] sm:$0xf]
    %v107 = vld [vmem:[%s1 + $0x134] sm:$0xf]
    %v108 = vld [vmem:[%s1 + $0x138] sm:$0xf]
    %v109 = vld [vmem:[%s1 + $0x13c] sm:$0xf]
    %v110 = vld [vmem:[%s1 + $0x140] sm:$0xf]
    %v111 = vld [vmem:[%s1 + $0x144] sm:$0xf]
    %v112 = vld [vmem:[%s1 + $0x148] sm:$0xf]
    %v113 = vld [vmem:[%s1 + $0x14c] sm:$0xf]
    %v114 = vld [vmem:[%s1 + $0x150] sm:$0xf]
    %v115 = vld [vmem:[%s1 + $0x154] sm:$0xf]
    %v116 = vld [vmem:[%s1 + $0x158] sm:$0xf]
    %v117 = vld [vmem:[%s1 + $0x15c] sm:$0xf]
    %v118 = vld [vmem:[%s1 + $0x160] sm:$0xf]
    %v119 = vld [vmem:[%s1 + $0x164] sm:$0xf]
    %v120 = vld [vmem:[%s1 + $0x168] sm:$0xf]
    %v121 = vld [vmem:[%s1 + $0x16c] sm:$0xf]
    %v122 = vld [vmem:[%s1 + $0x170] sm:$0xf]
    %v123 = vld [vmem:[%s1 + $0x174] sm:$0xf]
    %v124 = vld [vmem:[%s1 + $0x178] sm:$0xf]
    %v125 = vld [vmem:[%s1 + $0x17c] sm:$0xf]
    %v126 = vld [vmem:[%s1 + $0x180] sm:$0xf]
    %v127 = vld [vmem:[%s1 + $0x184] sm:$0xf]
    %v128 = vld [vmem:[%s1 + $0x188] sm:$0xf]
    %v129 = vld [vmem:[%s1 + $0x18c] sm:$0xf]
    %v130 = vld [vmem:[%s1 + $0x190] sm:$0xf]
    %v131 = vld [vmem:[%s1 + $0x194] sm:$0xf]
    %v132 = vld [vmem:[%s1 + $0x198] sm:$0xf]
    %v133 = vld [vmem:[%s1 + $0x19c] sm:$0xf]
    %v134 = vld [vmem:[%s1 + $0x1a0] sm:$0xf]
    %v135 = vld [vmem:[%s1 + $0x1a4] sm:$0xf]
    %v136 = vld [vmem:[%s1 + $0x1a8] sm:$0xf]
    %v137 = vld [vmem:[%s1 + $0x1ac] sm:$0xf]
    %v138 = vld [vmem:[%s1 + $0x1b0] sm:$0xf]
    %v139 = vld [vmem:[%s1 + $0x1b4] sm:$0xf]
    %v140 = vld [vmem:[%s1 + $0x1b8] sm:$0xf]
    %v141 = vld [vmem:[%s1 + $0x1bc] sm:$0xf]
    %v142 = vld [vmem:[%s1 + $0x1c0] sm:$0xf]
    %v143 = vld [vmem:[%s1 + $0x1c4] sm:$0xf]
    %v144 = vld [vmem:[%s1 + $0x1c8] sm:$0xf]
    %v145 = vld [vmem:[%s1 + $0x1cc] sm:$0xf]
    %v146 = vld [vmem:[%s1 + $0x1d0] sm:$0xf]
    %v147 = vld [vmem:[%s1 + $0x1d4] sm:$0xf]
    %v148 = vld [vmem:[%s1 + $0x1d8] sm:$0xf]
    %v149 = vld [vmem:[%s1 + $0x1dc] sm:$0xf]
    %v150 = vld [vmem:[%s1 + $0x1e0] sm:$0xf]
    %v151 = vld [vmem:[%s1 + $0x1e4] sm:$0xf]
    %v152 = vld [vmem:[%s1 + $0x1e8] sm:$0xf]
    %v153 = vld [vmem:[%s1 + $0x1ec] sm:$0xf]
    %v154 = vld [vmem:[%s1 + $0x1f0] sm:$0xf]
    %v155 = vld [vmem:[%s1 + $0x1f4] sm:$0xf]
    %v156 = vld [vmem:[%s1 + $0x1f8] sm:$0xf]
    %v157 = vld [vmem:[%s1 + $0x1fc] sm:$0xf]
    %v158 = vld [vmem:[%s1 + $0x200] sm:$0xf]
    %v159 = vld [vmem:[%s1 + $0x204] sm:$0xf]
    %v160 = vld [vmem:[%s1 + $0x208] sm:$0xf]
    %v161 = vld [vmem:[%s1 + $0x20c] sm:$0xf]
    %v162 = vld [vmem:[%s1 + $0x210] sm:$0xf]
    %v163 = vld [vmem:[%s1 + $0x214] sm:$0xf]
    %v164 = vld [vmem:[%s1 + $0x218] sm:$0xf]
    %v165 = vld [vmem:[%s1 + $0x21c] sm:$0xf]
    %v166 = vld [vmem:[%s1 + $0x220] sm:$0xf]
    %v167 = vld [vmem:[%s1 + $0x224] sm:$0xf]
    %v168 = vld [vmem:[%s1 + $0x228] sm:$0xf]
    %v169 = vld [vmem:[%s1 + $0x22c] sm:$0xf]
    %v170 = vld [vmem:[%s1 + $0x230] sm:$0xf]
    %v171 = vld [vmem:[%s1 + $0x234] sm:$0xf]
    %v172 = vld [vmem:[%s1 + $0x238] sm:$0xf]
    %v173 = vld [vmem:[%s1 + $0x23c] sm:$0xf]
    %v174 = vld [vmem:[%s1 + $0x240] sm:$0xf]
    %v175 = vld [vmem:[%s1 + $0x244] sm:$0xf]
    %v176 = vld [vmem:[%s1 + $0x248] sm:$0xf]
    %v177 = vld [vmem:[%s1 + $0x24c] sm:$0xf]
    %v178 = vld [vmem:[%s1 + $0x250] sm:$0xf]
    %v179 = vld [vmem:[%s1 + $0x254] sm:$0xf]
    %v180 = vld [vmem:[%s1 + $0x258] sm:$0xf]
    %v181 = vld [vmem:[%s1 + $0x25c] sm:$0xf]
    %v182 = vld [vmem:[%s1 + $0x260] sm:$0xf]
    %v183 = vld [vmem:[%s1 + $0x264] sm:$0xf]
    %v184 = vld [vmem:[%s1 + $0x268] sm:$0xf]
    %v185 = vld [vmem:[%s1 + $0x26c] sm:$0xf]
    %v186 = vld [vmem:[%s1 + $0x270] sm:$0xf]
    %v187 = vld [vmem:[%s1 + $0x274] sm:$0xf]
    %v188 = vld [vmem:[%s1 + $0x278] sm:$0xf]
    %v189 = vld [vmem:[%s1 + $0x27c] sm:$0xf]
    %v190 = vld [vmem:[%s1 + $0x280] sm:$0xf]
    %v191 = vld [vmem:[%s1 + $0x284] sm:$0xf]
    %v192 = vld [vmem:[%s1 + $0x288] sm:$0xf]
    %v193 = vld [vmem:[%s1 + $0x28c] sm:$0xf]
    %v194 = vld [vmem:[%s1 + $0x290] sm:$0xf]
    %v195 = vld [vmem:[%s1 + $0x294] sm:$0xf]
    %v196 = vld [vmem:[%s1 + $0x298] sm:$0xf]
    %v197 = vld [vmem:[%s1 + $0x29c] sm:$0xf]
    %v198 = vld [vmem:[%s1 + $0x2a0] sm:$0xf]
    %v199 = vld [vmem:[%s1 + $0x2a4] sm:$0xf]
    %v200 = vld [vmem:[%s1 + $0x2a8] sm:$0xf]
    %v201 = vld [vmem:[%s1 + $0x2ac] sm:$0xf]
    %v202 = vld [vmem:[%s1 + $0x2b0] sm:$0xf]
    %v203 = vld [vmem:[%s1 + $0x2b4] sm:$0xf]
    %v204 = vld [vmem:[%s1 + $0x2b8] sm:$0xf]
    %v205 = vld [vmem:[%s1 + $0x2bc] sm:$0xf]
    %v206 = vld [vmem:[%s1 + $0x2c0] sm:$0xf]
    %v207 = vld [vmem:[%s1 + $0x2c4] sm:$0xf]
    %v208 = vld [vmem:[%s1 + $0x2c8] sm:$0xf]
    %v209 = vld [vmem:[%s1 + $0x2cc] sm:$0xf]
    %v210 = vld [vmem:[%s1 + $0x2d0] sm:$0xf]
    %v211 = vld [vmem:[%s1 + $0x2d4] sm:$0xf]
    %v212 = vld [vmem:[%s1 + $0x2d8] sm:$0xf]
    %v213 = vld [vmem:[%s1 + $0x2dc] sm:$0xf]
    %v214 = vld [vmem:[%s1 + $0x2e0] sm:$0xf]
    %v215 = vld [vmem:[%s1 + $0x2e4] sm:$0xf]
    %v216 = vld [vmem:[%s1 + $0x2e8] sm:$0xf]
    %v217 = vld [vmem:[%s1 + $0x2ec] sm:$0xf]
    %v218 = vld [vmem:[%s1 + $0x2f0] sm:$0xf]
    %v219 = vld [vmem:[%s1 + $0x2f4] sm:$0xf]
    %v220 = vld [vmem:[%s1 + $0x2f8] sm:$0xf]
    %v221 = vld [vmem:[%s1 + $0x2fc] sm:$0xf]
    %v222 = vld [vmem:[%s1 + $0x300] sm:$0xf]
    %v223 = vld [vmem:[%s1 + $0x304] sm:$0xf]
    %v224 = vld [vmem:[%s1 + $0x308] sm:$0xf]
    %v225 = vld [vmem:[%s1 + $0x30c] sm:$0xf]
    %v226 = vld [vmem:[%s2] sm:$0x1]
    %v228 = vlaneseq
    %v229 = vshrl.u32 %v228, 7
    %v230 = vsub.s32 0, %v229
    %v231 = vrot.slane %v226, %v230
    %v235 = vcombine.high %v28, %v28
    %v237 = vunpack.c.l.s4 1966171168
    %v238 = vunpack.c.0.s8 %v237
    %v239 = vlaneseq
    %v240 = vshrl.u32 %v239, 7
    %v241 = vsub.s32 %v238, %v240
    %v242 = vrot.slane %v28, %v241
    %v244 = vunpack.c.l.s4 1966171168
    %v245 = vunpack.c.0.s8 %v244
    %v246 = vlaneseq
    %v247 = vshrl.u32 %v246, 7
    %v248 = vsub.s32 %v245, %v247
    %v249 = vrot.slane %v235, %v248
    %v250 = vcombine.high %v242, %v242
    %v251 = vcombine.high %v249, %v249
    %v253 = vunpack.c.l.s4 1966171168
    %v254 = vunpack.c.0.s8 %v253
    %v255 = vlaneseq
    %v256 = vshrl.u32 %v255, 7
    %v257 = vsub.s32 %v254, %v256
    %v258 = vrot.slane %v242, %v257
    %v260 = vunpack.c.l.s4 1966171168
    %v261 = vunpack.c.0.s8 %v260
    %v262 = vlaneseq
    %v263 = vshrl.u32 %v262, 7
    %v264 = vsub.s32 %v261, %v263
    %v265 = vrot.slane %v249, %v264
    %v267 = vunpack.c.l.s4 1966171168
    %v268 = vunpack.c.0.s8 %v267
    %v269 = vlaneseq
    %v270 = vshrl.u32 %v269, 7
    %v271 = vsub.s32 %v268, %v270
    %v272 = vrot.slane %v250, %v271
    %v274 = vunpack.c.l.s4 1966171168
    %v275 = vunpack.c.0.s8 %v274
    %v276 = vlaneseq
    %v277 = vshrl.u32 %v276, 7
    %v278 = vsub.s32 %v275, %v277
    %v279 = vrot.slane %v251, %v278
    %v280 = vcombine.high %v258, %v258
    %v281 = vcombine.high %v265, %v265
    %v282 = vcombine.high %v272, %v272
    %v283 = vcombine.high %v279, %v279
    %v284 = vcombine.high %v29, %v29
    %v286 = vunpack.c.l.s4 1966171168
    %v287 = vunpack.c.0.s8 %v286
    %v288 = vlaneseq
    %v289 = vshrl.u32 %v288, 7
    %v290 = vsub.s32 %v287, %v289
    %v291 = vrot.slane %v29, %v290
    %v293 = vunpack.c.l.s4 1966171168
    %v294 = vunpack.c.0.s8 %v293
    %v295 = vlaneseq
    %v296 = vshrl.u32 %v295, 7
    %v297 = vsub.s32 %v294, %v296
    %v298 = vrot.slane %v284, %v297
    %v299 = vcombine.high %v291, %v291
    %v301 = vunpack.c.l.s4 1966171168
    %v302 = vunpack.c.0.s8 %v301
    %v303 = vlaneseq
    %v304 = vshrl.u32 %v303, 7
    %v305 = vsub.s32 %v302, %v304
    %v306 = vrot.slane %v291, %v305
    %v308 = vunpack.c.l.s4 1966171168
    %v309 = vunpack.c.0.s8 %v308
    %v310 = vlaneseq
    %v311 = vshrl.u32 %v310, 7
    %v312 = vsub.s32 %v309, %v311
    %v313 = vrot.slane %v298, %v312
    %v315 = vunpack.c.l.s4 1966171168
    %v316 = vunpack.c.0.s8 %v315
    %v317 = vlaneseq
    %v318 = vshrl.u32 %v317, 7
    %v319 = vsub.s32 %v316, %v318
    %v320 = vrot.slane %v299, %v319
    %v321 = vcombine.high %v306, %v306
    %v322 = vcombine.high %v320, %v320
    %v531 = vunpack.c.l.b16 %v30
    %v532 = vunpack.c.l.b16 %v31
    %v533 = vunpack.c.l.b16 %v32
    %v534 = vunpack.c.l.b16 %v33
    %v535 = vunpack.c.l.b16 %v34
    %v536 = vunpack.c.l.b16 %v35
    %v537 = vunpack.c.l.b16 %v36
    %v538 = vunpack.c.l.b16 %v37
    %v539 = vunpack.c.l.b16 %v38
    %v540 = vunpack.c.l.b16 %v39
    %v541 = vunpack.c.l.b16 %v40
    %v542 = vunpack.c.l.b16 %v41
    %v543 = vunpack.c.l.b16 %v42
    %v544 = vunpack.c.l.b16 %v43
    %v545 = vunpack.c.l.b16 %v44
    %v546 = vunpack.c.l.b16 %v45
    %v547 = vunpack.c.l.b16 %v46
    %v548 = vunpack.c.l.b16 %v47
    %v549 = vunpack.c.l.b16 %v48
    %v550 = vunpack.c.l.b16 %v49
    %v551 = vunpack.c.l.b16 %v50
    %v552 = vunpack.c.l.b16 %v51
    %v553 = vunpack.c.l.b16 %v52
    %v554 = vunpack.c.l.b16 %v53
    %v555 = vunpack.c.l.b16 %v54
    %v556 = vunpack.c.l.b16 %v55
    %v557 = vunpack.c.l.b16 %v56
    %v558 = vunpack.c.l.b16 %v57
    %v559 = vunpack.c.l.b16 %v58
    %v560 = vunpack.c.l.b16 %v59
    %v561 = vunpack.c.l.b16 %v60
    %v562 = vunpack.c.l.b16 %v61
    %v563 = vunpack.c.l.b16 %v62
    %v564 = vunpack.c.l.b16 %v63
    %v565 = vunpack.c.l.b16 %v64
    %v566 = vunpack.c.l.b16 %v65
    %v567 = vunpack.c.l.b16 %v66
    %v568 = vunpack.c.l.b16 %v67
    %v569 = vunpack.c.l.b16 %v68
    %v570 = vunpack.c.l.b16 %v69
    %v571 = vunpack.c.l.b16 %v70
    %v572 = vunpack.c.l.b16 %v71
    %v573 = vunpack.c.l.b16 %v72
    %v574 = vunpack.c.l.b16 %v73
    %v575 = vunpack.c.l.b16 %v74
    %v576 = vunpack.c.l.b16 %v75
    %v577 = vunpack.c.l.b16 %v76
    %v578 = vunpack.c.l.b16 %v77
    %v579 = vunpack.c.l.b16 %v78
    %v580 = vunpack.c.l.b16 %v79
    %v581 = vunpack.c.l.b16 %v80
    %v582 = vunpack.c.l.b16 %v81
    %v583 = vunpack.c.l.b16 %v82
    %v584 = vunpack.c.l.b16 %v83
    %v585 = vunpack.c.l.b16 %v84
    %v586 = vunpack.c.l.b16 %v85
    %v587 = vunpack.c.l.b16 %v86
    %v588 = vunpack.c.l.b16 %v87
    %v589 = vunpack.c.l.b16 %v88
    %v590 = vunpack.c.l.b16 %v89
    %v591 = vunpack.c.l.b16 %v90
    %v592 = vunpack.c.l.b16 %v91
    %v593 = vunpack.c.l.b16 %v92
    %v594 = vunpack.c.l.b16 %v93
    %v595 = vunpack.c.l.b16 %v94
    %v596 = vunpack.c.l.b16 %v95
    %v597 = vunpack.c.l.b16 %v96
    %v598 = vunpack.c.l.b16 %v97
    %v599 = vunpack.c.l.b16 %v98
    %v600 = vunpack.c.l.b16 %v99
    %v601 = vunpack.c.l.b16 %v100
    %v602 = vunpack.c.l.b16 %v101
    %v603 = vunpack.c.l.b16 %v102
    %v604 = vunpack.c.l.b16 %v103
    %v605 = vunpack.c.l.b16 %v104
    %v606 = vunpack.c.l.b16 %v105
    %v607 = vunpack.c.l.b16 %v106
    %v608 = vunpack.c.l.b16 %v107
    %v609 = vunpack.c.l.b16 %v108
    %v610 = vunpack.c.l.b16 %v109
    %v611 = vunpack.c.l.b16 %v110
    %v612 = vunpack.c.l.b16 %v111
    %v613 = vunpack.c.l.b16 %v112
    %v614 = vunpack.c.l.b16 %v113
    %v615 = vunpack.c.l.b16 %v114
    %v616 = vunpack.c.l.b16 %v115
    %v617 = vunpack.c.l.b16 %v116
    %v618 = vunpack.c.l.b16 %v117
    %v619 = vunpack.c.l.b16 %v118
    %v620 = vunpack.c.l.b16 %v119
    %v621 = vunpack.c.l.b16 %v120
    %v622 = vunpack.c.l.b16 %v121
    %v623 = vunpack.c.l.b16 %v122
    %v624 = vunpack.c.l.b16 %v123
    %v625 = vunpack.c.l.b16 %v124
    %v626 = vunpack.c.l.b16 %v125
    %v627 = vunpack.c.l.b16 %v126
    %v628 = vunpack.c.l.b16 %v127
    %v629 = vunpack.c.l.b16 %v128
    %v630 = vunpack.c.l.b16 %v129
    %v631 = vunpack.c.l.b16 %v130
    %v632 = vunpack.c.l.b16 %v131
    %v633 = vunpack.c.l.b16 %v132
    %v634 = vunpack.c.l.b16 %v133
    %v635 = vunpack.c.l.b16 %v134
    %v636 = vunpack.c.l.b16 %v135
    %v637 = vunpack.c.l.b16 %v136
    %v638 = vunpack.c.l.b16 %v137
    %v639 = vunpack.c.l.b16 %v138
    %v640 = vunpack.c.l.b16 %v139
    %v641 = vunpack.c.l.b16 %v140
    %v642 = vunpack.c.l.b16 %v141
    %v643 = vunpack.c.l.b16 %v142
    %v644 = vunpack.c.l.b16 %v143
    %v645 = vunpack.c.l.b16 %v144
    %v646 = vunpack.c.l.b16 %v145
    %v647 = vunpack.c.l.b16 %v146
    %v648 = vunpack.c.l.b16 %v147
    %v649 = vunpack.c.l.b16 %v148
    %v650 = vunpack.c.l.b16 %v149
    %v651 = vunpack.c.l.b16 %v150
    %v652 = vunpack.c.l.b16 %v151
    %v653 = vunpack.c.l.b16 %v152
    %v654 = vunpack.c.l.b16 %v153
    %v655 = vunpack.c.l.b16 %v154
    %v656 = vunpack.c.l.b16 %v155
    %v657 = vunpack.c.l.b16 %v156
    %v658 = vunpack.c.l.b16 %v157
    %v659 = vunpack.c.l.b16 %v158
    %v660 = vunpack.c.l.b16 %v159
    %v661 = vunpack.c.l.b16 %v160
    %v662 = vunpack.c.l.b16 %v161
    %v663 = vunpack.c.l.b16 %v162
    %v664 = vunpack.c.l.b16 %v163
    %v665 = vunpack.c.l.b16 %v164
    %v666 = vunpack.c.l.b16 %v165
    %v667 = vunpack.c.l.b16 %v166
    %v668 = vunpack.c.l.b16 %v167
    %v669 = vunpack.c.l.b16 %v168
    %v670 = vunpack.c.l.b16 %v169
    %v671 = vunpack.c.l.b16 %v170
    %v672 = vunpack.c.l.b16 %v171
    %v673 = vunpack.c.l.b16 %v172
    %v674 = vunpack.c.l.b16 %v173
    %v675 = vunpack.c.l.b16 %v174
    %v676 = vunpack.c.l.b16 %v175
    %v677 = vunpack.c.l.b16 %v176
    %v678 = vunpack.c.l.b16 %v177
    %v679 = vunpack.c.l.b16 %v178
    %v680 = vunpack.c.l.b16 %v179
    %v681 = vunpack.c.l.b16 %v180
    %v682 = vunpack.c.l.b16 %v181
    %v683 = vunpack.c.l.b16 %v182
    %v684 = vunpack.c.l.b16 %v183
    %v685 = vunpack.c.l.b16 %v184
    %v686 = vunpack.c.l.b16 %v185
    %v687 = vunpack.c.l.b16 %v186
    %v688 = vunpack.c.l.b16 %v187
    %v689 = vunpack.c.l.b16 %v188
    %v690 = vunpack.c.l.b16 %v189
    %v691 = vunpack.c.l.b16 %v190
    %v692 = vunpack.c.l.b16 %v191
    %v693 = vunpack.c.l.b16 %v192
    %v694 = vunpack.c.l.b16 %v193
    %v695 = vunpack.c.l.b16 %v194
    %v696 = vunpack.c.l.b16 %v195
    %v697 = vunpack.c.l.b16 %v196
    %v698 = vunpack.c.l.b16 %v197
    %v699 = vunpack.c.l.b16 %v198
    %v700 = vunpack.c.l.b16 %v199
    %v701 = vunpack.c.l.b16 %v200
    %v702 = vunpack.c.l.b16 %v201
    %v703 = vunpack.c.l.b16 %v202
    %v704 = vunpack.c.l.b16 %v203
    %v705 = vunpack.c.l.b16 %v204
    %v706 = vunpack.c.l.b16 %v205
    %v707 = vunpack.c.l.b16 %v206
    %v708 = vunpack.c.l.b16 %v207
    %v709 = vunpack.c.l.b16 %v208
    %v710 = vunpack.c.l.b16 %v209
    %v711 = vunpack.c.l.b16 %v210
    %v712 = vunpack.c.l.b16 %v211
    %v713 = vunpack.c.l.b16 %v212
    %v714 = vunpack.c.l.b16 %v213
    %v715 = vunpack.c.l.b16 %v214
    %v716 = vunpack.c.l.b16 %v215
    %v717 = vunpack.c.l.b16 %v216
    %v718 = vunpack.c.l.b16 %v217
    %v719 = vunpack.c.l.b16 %v218
    %v720 = vunpack.c.l.b16 %v219
    %v721 = vunpack.c.l.b16 %v220
    %v722 = vunpack.c.l.b16 %v221
    %v723 = vunpack.c.l.b16 %v222
    %v724 = vunpack.c.l.b16 %v223
    %v725 = vunpack.c.l.b16 %v224
    %v726 = vunpack.c.l.b16 %v225
    %v727 = vpack.c.b16 %v532, %v531
    %v728 = vpack.c.b16 %v534, %v533
    %v729 = vpack.c.b16 %v536, %v535
    %v730 = vpack.c.b16 %v538, %v537
    %v731 = vpack.c.b16 %v540, %v539
    %v732 = vpack.c.b16 %v542, %v541
    %v733 = vpack.c.b16 %v544, %v543
    %v734 = vpack.c.b16 %v546, %v545
    %v735 = vpack.c.b16 %v548, %v547
    %v736 = vpack.c.b16 %v550, %v549
    %v737 = vpack.c.b16 %v552, %v551
    %v738 = vpack.c.b16 %v554, %v553
    %v739 = vpack.c.b16 %v556, %v555
    %v740 = vpack.c.b16 %v558, %v557
    %v741 = vpack.c.b16 %v560, %v559
    %v742 = vpack.c.b16 %v562, %v561
    %v743 = vpack.c.b16 %v564, %v563
    %v744 = vpack.c.b16 %v566, %v565
    %v745 = vpack.c.b16 %v568, %v567
    %v746 = vpack.c.b16 %v570, %v569
    %v747 = vpack.c.b16 %v572, %v571
    %v748 = vpack.c.b16 %v574, %v573
    %v749 = vpack.c.b16 %v576, %v575
    %v750 = vpack.c.b16 %v578, %v577
    %v751 = vpack.c.b16 %v580, %v579
    %v752 = vpack.c.b16 %v582, %v581
    %v753 = vpack.c.b16 %v584, %v583
    %v754 = vpack.c.b16 %v586, %v585
    %v755 = vpack.c.b16 %v588, %v587
    %v756 = vpack.c.b16 %v590, %v589
    %v757 = vpack.c.b16 %v592, %v591
    %v758 = vpack.c.b16 %v594, %v593
    %v759 = vpack.c.b16 %v596, %v595
    %v760 = vpack.c.b16 %v598, %v597
    %v761 = vpack.c.b16 %v600, %v599
    %v762 = vpack.c.b16 %v602, %v601
    %v763 = vpack.c.b16 %v604, %v603
    %v764 = vpack.c.b16 %v606, %v605
    %v765 = vpack.c.b16 %v608, %v607
    %v766 = vpack.c.b16 %v610, %v609
    %v767 = vpack.c.b16 %v612, %v611
    %v768 = vpack.c.b16 %v614, %v613
    %v769 = vpack.c.b16 %v616, %v615
    %v770 = vpack.c.b16 %v618, %v617
    %v771 = vpack.c.b16 %v620, %v619
    %v772 = vpack.c.b16 %v622, %v621
    %v773 = vpack.c.b16 %v624, %v623
    %v774 = vpack.c.b16 %v626, %v625
    %v775 = vpack.c.b16 %v628, %v627
    %v776 = vpack.c.b16 %v630, %v629
    %v777 = vpack.c.b16 %v632, %v631
    %v778 = vpack.c.b16 %v634, %v633
    %v779 = vpack.c.b16 %v636, %v635
    %v780 = vpack.c.b16 %v638, %v637
    %v781 = vpack.c.b16 %v640, %v639
    %v782 = vpack.c.b16 %v642, %v641
    %v783 = vpack.c.b16 %v644, %v643
    %v784 = vpack.c.b16 %v646, %v645
    %v785 = vpack.c.b16 %v648, %v647
    %v786 = vpack.c.b16 %v650, %v649
    %v787 = vpack.c.b16 %v652, %v651
    %v788 = vpack.c.b16 %v654, %v653
    %v789 = vpack.c.b16 %v656, %v655
    %v790 = vpack.c.b16 %v658, %v657
    %v791 = vpack.c.b16 %v660, %v659
    %v792 = vpack.c.b16 %v662, %v661
    %v793 = vpack.c.b16 %v664, %v663
    %v794 = vpack.c.b16 %v666, %v665
    %v795 = vpack.c.b16 %v668, %v667
    %v796 = vpack.c.b16 %v670, %v669
    %v797 = vpack.c.b16 %v672, %v671
    %v798 = vpack.c.b16 %v674, %v673
    %v799 = vpack.c.b16 %v676, %v675
    %v800 = vpack.c.b16 %v678, %v677
    %v801 = vpack.c.b16 %v680, %v679
    %v802 = vpack.c.b16 %v682, %v681
    %v803 = vpack.c.b16 %v684, %v683
    %v804 = vpack.c.b16 %v686, %v685
    %v805 = vpack.c.b16 %v688, %v687
    %v806 = vpack.c.b16 %v690, %v689
    %v807 = vpack.c.b16 %v692, %v691
    %v808 = vpack.c.b16 %v694, %v693
    %v809 = vpack.c.b16 %v696, %v695
    %v810 = vpack.c.b16 %v698, %v697
    %v811 = vpack.c.b16 %v700, %v699
    %v812 = vpack.c.b16 %v702, %v701
    %v813 = vpack.c.b16 %v704, %v703
    %v814 = vpack.c.b16 %v706, %v705
    %v815 = vpack.c.b16 %v708, %v707
    %v816 = vpack.c.b16 %v710, %v709
    %v817 = vpack.c.b16 %v712, %v711
    %v818 = vpack.c.b16 %v714, %v713
    %v819 = vpack.c.b16 %v716, %v715
    %v820 = vpack.c.b16 %v718, %v717
    %v821 = vpack.c.b16 %v720, %v719
    %v822 = vpack.c.b16 %v722, %v721
    %v823 = vpack.c.b16 %v724, %v723
    %v824 = vpack.c.b16 %v726, %v725
    %vm923 = vcmask 261120
    %v925 = vsel %vm923, %v313, 0
    %927 = vmatprep.subr.bf16.mxu0 0
    %928 = vmatpush1.bf16.msra.mxu0 %v727
    %929 = vmatprep.subr.bf16.mxu0 0
    %930 = vmatpush1.bf16.msra.mxu0 %v728
    %931 = vmatprep.subr.bf16.mxu0 0
    %932 = vmatpush1.bf16.msra.mxu0 %v729
    %933 = vmatprep.subr.bf16.mxu0 0
    %934 = vmatpush1.bf16.msra.mxu0 %v730
    %935 = vmatprep.subr.bf16.mxu0 0
    %936 = vmatpush1.bf16.msra.mxu0 %v731
    %937 = vmatprep.subr.bf16.mxu0 0
    %938 = vmatpush1.bf16.msra.mxu0 %v732
    %939 = vmatprep.subr.bf16.mxu0 0
    %940 = vmatpush1.bf16.msra.mxu0 %v733
    %941 = vmatprep.subr.bf16.mxu0 0
    %942 = vmatpush1.bf16.msra.mxu0 %v734
    %943 = vmatprep.subr.bf16.mxu0 0
    %944 = vmatpush1.bf16.msra.mxu0 %v735
    %945 = vmatprep.subr.bf16.mxu0 0
    %946 = vmatpush1.bf16.msra.mxu0 %v736
    %947 = vmatprep.subr.bf16.mxu0 0
    %948 = vmatpush1.bf16.msra.mxu0 %v737
    %949 = vmatprep.subr.bf16.mxu0 0
    %950 = vmatpush1.bf16.msra.mxu0 %v738
    %951 = vmatprep.subr.bf16.mxu0 0
    %952 = vmatpush1.bf16.msra.mxu0 %v739
    %953 = vmatprep.subr.bf16.mxu0 0
    %954 = vmatpush1.bf16.msra.mxu0 %v740
    %955 = vmatprep.subr.bf16.mxu0 0
    %956 = vmatpush1.bf16.msra.mxu0 %v741
    %957 = vmatprep.subr.bf16.mxu0 0
    %958 = vmatpush1.bf16.msra.mxu0 %v742
    %959 = vmatprep.mubr.bf16.mxu0 %v272
    %960 = vmatmul.mubr.bf16.gmra.mrb[0].mxu0 %v258
    %v961 = vpop.f32.mrb[0].mxu0
    %v962 = vadd.f32 %v231, %v961
    %v963 = vpop.f32.mrb[0].mxu0
    %v964 = vpop.f32.mrb[0].mxu0
    %v965 = vpop.f32.mrb[0].mxu0
    %966 = vdwg.mxu0
    %967 = vmatprep.subr.bf16.mxu0 0
    %968 = vmatpush1.bf16.msra.mxu0 %v743
    %969 = vmatprep.subr.bf16.mxu0 0
    %970 = vmatpush1.bf16.msra.mxu0 %v744
    %971 = vmatprep.subr.bf16.mxu0 0
    %972 = vmatpush1.bf16.msra.mxu0 %v745
    %973 = vmatprep.subr.bf16.mxu0 0
    %974 = vmatpush1.bf16.msra.mxu0 %v746
    %975 = vmatprep.subr.bf16.mxu0 0
    %976 = vmatpush1.bf16.msra.mxu0 %v747
    %977 = vmatprep.subr.bf16.mxu0 0
    %978 = vmatpush1.bf16.msra.mxu0 %v748
    %979 = vmatprep.subr.bf16.mxu0 0
    %980 = vmatpush1.bf16.msra.mxu0 %v749
    %981 = vmatprep.subr.bf16.mxu0 0
    %982 = vmatpush1.bf16.msra.mxu0 %v750
    %983 = vmatprep.subr.bf16.mxu0 0
    %984 = vmatpush1.bf16.msra.mxu0 %v751
    %985 = vmatprep.subr.bf16.mxu0 0
    %986 = vmatpush1.bf16.msra.mxu0 %v752
    %987 = vmatprep.subr.bf16.mxu0 0
    %988 = vmatpush1.bf16.msra.mxu0 %v753
    %989 = vmatprep.subr.bf16.mxu0 0
    %990 = vmatpush1.bf16.msra.mxu0 %v754
    %991 = vmatprep.subr.bf16.mxu0 0
    %992 = vmatpush1.bf16.msra.mxu0 %v755
    %993 = vmatprep.subr.bf16.mxu0 0
    %994 = vmatpush1.bf16.msra.mxu0 %v756
    %995 = vmatprep.subr.bf16.mxu0 0
    %996 = vmatpush1.bf16.msra.mxu0 %v757
    %997 = vmatprep.subr.bf16.mxu0 0
    %998 = vmatpush1.bf16.msra.mxu0 %v758
    %999 = vmatprep.mubr.bf16.mxu0 %v282
    %1000 = vmatmul.mubr.bf16.gmra.mrb[0].mxu0 %v280
    %v1001 = vpop.f32.mrb[0].mxu0
    %v1002 = vadd.f32 %v962, %v1001
    %v1003 = vpop.f32.mrb[0].mxu0
    %v1004 = vpop.f32.mrb[0].mxu0
    %v1005 = vpop.f32.mrb[0].mxu0
    %1006 = vdwg.mxu0
    %1007 = vmatprep.subr.bf16.mxu0 0
    %1008 = vmatpush1.bf16.msra.mxu0 %v759
    %1009 = vmatprep.subr.bf16.mxu0 0
    %1010 = vmatpush1.bf16.msra.mxu0 %v760
    %1011 = vmatprep.subr.bf16.mxu0 0
    %1012 = vmatpush1.bf16.msra.mxu0 %v761
    %1013 = vmatprep.subr.bf16.mxu0 0
    %1014 = vmatpush1.bf16.msra.mxu0 %v762
    %1015 = vmatprep.subr.bf16.mxu0 0
    %1016 = vmatpush1.bf16.msra.mxu0 %v763
    %1017 = vmatprep.subr.bf16.mxu0 0
    %1018 = vmatpush1.bf16.msra.mxu0 %v764
    %1019 = vmatprep.subr.bf16.mxu0 0
    %1020 = vmatpush1.bf16.msra.mxu0 %v765
    %1021 = vmatprep.subr.bf16.mxu0 0
    %1022 = vmatpush1.bf16.msra.mxu0 %v766
    %1023 = vmatprep.subr.bf16.mxu0 0
    %1024 = vmatpush1.bf16.msra.mxu0 %v767
    %1025 = vmatprep.subr.bf16.mxu0 0
    %1026 = vmatpush1.bf16.msra.mxu0 %v768
    %1027 = vmatprep.subr.bf16.mxu0 0
    %1028 = vmatpush1.bf16.msra.mxu0 %v769
    %1029 = vmatprep.subr.bf16.mxu0 0
    %1030 = vmatpush1.bf16.msra.mxu0 %v770
    %1031 = vmatprep.subr.bf16.mxu0 0
    %1032 = vmatpush1.bf16.msra.mxu0 %v771
    %1033 = vmatprep.subr.bf16.mxu0 0
    %1034 = vmatpush1.bf16.msra.mxu0 %v772
    %1035 = vmatprep.subr.bf16.mxu0 0
    %1036 = vmatpush1.bf16.msra.mxu0 %v773
    %1037 = vmatprep.subr.bf16.mxu0 0
    %1038 = vmatpush1.bf16.msra.mxu0 %v774
    %1039 = vmatprep.mubr.bf16.mxu0 %v279
    %1040 = vmatmul.mubr.bf16.gmra.mrb[0].mxu0 %v265
    %v1041 = vpop.f32.mrb[0].mxu0
    %v1042 = vadd.f32 %v1002, %v1041
    %v1043 = vpop.f32.mrb[0].mxu0
    %v1044 = vpop.f32.mrb[0].mxu0
    %v1045 = vpop.f32.mrb[0].mxu0
    %1046 = vdwg.mxu0
    %1047 = vmatprep.subr.bf16.mxu0 0
    %1048 = vmatpush1.bf16.msra.mxu0 %v775
    %1049 = vmatprep.subr.bf16.mxu0 0
    %1050 = vmatpush1.bf16.msra.mxu0 %v776
    %1051 = vmatprep.subr.bf16.mxu0 0
    %1052 = vmatpush1.bf16.msra.mxu0 %v777
    %1053 = vmatprep.subr.bf16.mxu0 0
    %1054 = vmatpush1.bf16.msra.mxu0 %v778
    %1055 = vmatprep.subr.bf16.mxu0 0
    %1056 = vmatpush1.bf16.msra.mxu0 %v779
    %1057 = vmatprep.subr.bf16.mxu0 0
    %1058 = vmatpush1.bf16.msra.mxu0 %v780
    %1059 = vmatprep.subr.bf16.mxu0 0
    %1060 = vmatpush1.bf16.msra.mxu0 %v781
    %1061 = vmatprep.subr.bf16.mxu0 0
    %1062 = vmatpush1.bf16.msra.mxu0 %v782
    %1063 = vmatprep.subr.bf16.mxu0 0
    %1064 = vmatpush1.bf16.msra.mxu0 %v783
    %1065 = vmatprep.subr.bf16.mxu0 0
    %1066 = vmatpush1.bf16.msra.mxu0 %v784
    %1067 = vmatprep.subr.bf16.mxu0 0
    %1068 = vmatpush1.bf16.msra.mxu0 %v785
    %1069 = vmatprep.subr.bf16.mxu0 0
    %1070 = vmatpush1.bf16.msra.mxu0 %v786
    %1071 = vmatprep.subr.bf16.mxu0 0
    %1072 = vmatpush1.bf16.msra.mxu0 %v787
    %1073 = vmatprep.subr.bf16.mxu0 0
    %1074 = vmatpush1.bf16.msra.mxu0 %v788
    %1075 = vmatprep.subr.bf16.mxu0 0
    %1076 = vmatpush1.bf16.msra.mxu0 %v789
    %1077 = vmatprep.subr.bf16.mxu0 0
    %1078 = vmatpush1.bf16.msra.mxu0 %v790
    %1079 = vmatprep.mubr.bf16.mxu0 %v283
    %1080 = vmatmul.mubr.bf16.gmra.mrb[0].mxu0 %v281
    %v1081 = vpop.f32.mrb[0].mxu0
    %v1082 = vadd.f32 %v1042, %v1081
    %v1083 = vpop.f32.mrb[0].mxu0
    %v1084 = vpop.f32.mrb[0].mxu0
    %v1085 = vpop.f32.mrb[0].mxu0
    %1086 = vdwg.mxu0
    %1087 = vmatprep.subr.bf16.mxu0 0
    %1088 = vmatpush1.bf16.msra.mxu0 %v791
    %1089 = vmatprep.subr.bf16.mxu0 0
    %1090 = vmatpush1.bf16.msra.mxu0 %v792
    %1091 = vmatprep.subr.bf16.mxu0 0
    %1092 = vmatpush1.bf16.msra.mxu0 %v793
    %1093 = vmatprep.subr.bf16.mxu0 0
    %1094 = vmatpush1.bf16.msra.mxu0 %v794
    %1095 = vmatprep.subr.bf16.mxu0 0
    %1096 = vmatpush1.bf16.msra.mxu0 %v795
    %1097 = vmatprep.subr.bf16.mxu0 0
    %1098 = vmatpush1.bf16.msra.mxu0 %v796
    %1099 = vmatprep.subr.bf16.mxu0 0
    %1100 = vmatpush1.bf16.msra.mxu0 %v797
    %1101 = vmatprep.subr.bf16.mxu0 0
    %1102 = vmatpush1.bf16.msra.mxu0 %v798
    %1103 = vmatprep.subr.bf16.mxu0 0
    %1104 = vmatpush1.bf16.msra.mxu0 %v799
    %1105 = vmatprep.subr.bf16.mxu0 0
    %1106 = vmatpush1.bf16.msra.mxu0 %v800
    %1107 = vmatprep.subr.bf16.mxu0 0
    %1108 = vmatpush1.bf16.msra.mxu0 %v801
    %1109 = vmatprep.subr.bf16.mxu0 0
    %1110 = vmatpush1.bf16.msra.mxu0 %v802
    %1111 = vmatprep.subr.bf16.mxu0 0
    %1112 = vmatpush1.bf16.msra.mxu0 %v803
    %1113 = vmatprep.subr.bf16.mxu0 0
    %1114 = vmatpush1.bf16.msra.mxu0 %v804
    %1115 = vmatprep.subr.bf16.mxu0 0
    %1116 = vmatpush1.bf16.msra.mxu0 %v805
    %1117 = vmatprep.subr.bf16.mxu0 0
    %1118 = vmatpush1.bf16.msra.mxu0 %v806
    %1119 = vmatprep.mubr.bf16.mxu0 %v320
    %1120 = vmatmul.mubr.bf16.gmra.mrb[0].mxu0 %v306
    %v1121 = vpop.f32.mrb[0].mxu0
    %v1122 = vadd.f32 %v1082, %v1121
    %v1123 = vpop.f32.mrb[0].mxu0
    %v1124 = vpop.f32.mrb[0].mxu0
    %v1125 = vpop.f32.mrb[0].mxu0
    %1126 = vdwg.mxu0
    %1127 = vmatprep.subr.bf16.mxu0 0
    %1128 = vmatpush1.bf16.msra.mxu0 %v807
    %1129 = vmatprep.subr.bf16.mxu0 0
    %1130 = vmatpush1.bf16.msra.mxu0 %v808
    %1131 = vmatprep.subr.bf16.mxu0 0
    %1132 = vmatpush1.bf16.msra.mxu0 %v809
    %1133 = vmatprep.subr.bf16.mxu0 0
    %1134 = vmatpush1.bf16.msra.mxu0 %v810
    %1135 = vmatprep.subr.bf16.mxu0 0
    %1136 = vmatpush1.bf16.msra.mxu0 %v811
    %1137 = vmatprep.subr.bf16.mxu0 0
    %1138 = vmatpush1.bf16.msra.mxu0 %v812
    %1139 = vmatprep.subr.bf16.mxu0 0
    %1140 = vmatpush1.bf16.msra.mxu0 %v813
    %1141 = vmatprep.subr.bf16.mxu0 0
    %1142 = vmatpush1.bf16.msra.mxu0 %v814
    %1143 = vmatprep.subr.bf16.mxu0 0
    %1144 = vmatpush1.bf16.msra.mxu0 %v815
    %1145 = vmatprep.subr.bf16.mxu0 0
    %1146 = vmatpush1.bf16.msra.mxu0 %v816
    %1147 = vmatprep.subr.bf16.mxu0 0
    %1148 = vmatpush1.bf16.msra.mxu0 %v817
    %1149 = vmatprep.subr.bf16.mxu0 0
    %1150 = vmatpush1.bf16.msra.mxu0 %v818
    %1151 = vmatprep.subr.bf16.mxu0 0
    %1152 = vmatpush1.bf16.msra.mxu0 %v819
    %1153 = vmatprep.subr.bf16.mxu0 0
    %1154 = vmatpush1.bf16.msra.mxu0 %v820
    %1155 = vmatprep.subr.bf16.mxu0 0
    %1156 = vmatpush1.bf16.msra.mxu0 %v821
    %1157 = vmatprep.subr.bf16.mxu0 0
    %1158 = vmatpush1.bf16.msra.mxu0 %v822
    %1159 = vmatprep.mubr.bf16.mxu0 %v322
    %1160 = vmatmul.mubr.bf16.gmra.mrb[0].mxu0 %v321
    %v1161 = vpop.f32.mrb[0].mxu0
    %v1162 = vadd.f32 %v1122, %v1161
    %v1163 = vpop.f32.mrb[0].mxu0
    %v1164 = vpop.f32.mrb[0].mxu0
    %v1165 = vpop.f32.mrb[0].mxu0
    %1166 = vdwg.mxu0
    %1167 = vmatprep.subr.bf16.mxu0 0
    %1168 = vmatpush1.bf16.msra.mxu0 %v823
    %1169 = vmatprep.subr.bf16.mxu0 0
    %1170 = vmatpush1.bf16.msra.mxu0 %v824
    %1171 = vmatprep.subr.bf16.mxu0 0
    %1172 = vmatpush1.bf16.msra.mxu0 0
    %1173 = vmatprep.subr.bf16.mxu0 0
    %1174 = vmatpush1.bf16.msra.mxu0 0
    %1175 = vmatprep.subr.bf16.mxu0 0
    %1176 = vmatpush1.bf16.msra.mxu0 0
    %1177 = vmatprep.subr.bf16.mxu0 0
    %1178 = vmatpush1.bf16.msra.mxu0 0
    %1179 = vmatprep.subr.bf16.mxu0 0
    %1180 = vmatpush1.bf16.msra.mxu0 0
    %1181 = vmatprep.subr.bf16.mxu0 0
    %1182 = vmatpush1.bf16.msra.mxu0 0
    %1183 = vmatprep.subr.bf16.mxu0 0
    %1184 = vmatpush1.bf16.msra.mxu0 0
    %1185 = vmatprep.subr.bf16.mxu0 0
    %1186 = vmatpush1.bf16.msra.mxu0 0
    %1187 = vmatprep.subr.bf16.mxu0 0
    %1188 = vmatpush1.bf16.msra.mxu0 0
    %1189 = vmatprep.subr.bf16.mxu0 0
    %1190 = vmatpush1.bf16.msra.mxu0 0
    %1191 = vmatprep.subr.bf16.mxu0 0
    %1192 = vmatpush1.bf16.msra.mxu0 0
    %1193 = vmatprep.subr.bf16.mxu0 0
    %1194 = vmatpush1.bf16.msra.mxu0 0
    %1195 = vmatprep.subr.bf16.mxu0 0
    %1196 = vmatpush1.bf16.msra.mxu0 0
    %1197 = vmatprep.subr.bf16.mxu0 0
    %1198 = vmatpush1.bf16.msra.mxu0 0
    %1199 = vmatprep.mubr.bf16.mxu0 0
    %1200 = vmatmul.mubr.bf16.gmra.mrb[0].mxu0 %v925
    %v1201 = vpop.f32.mrb[0].mxu0
    %v1202 = vadd.f32 %v1162, %v1201
    %v1203 = vpop.f32.mrb[0].mxu0
    %v1204 = vpop.f32.mrb[0].mxu0
    %v1205 = vpop.f32.mrb[0].mxu0
    %1206 = vdwg.mxu0
    %1207 = vst [vmem:[#allocation2] sm:$0x3] %v1202
    %v1208 = vmax.f32 %v1202, 0.0
    %v1209 = vpack.c.bf16 %v1208, %v1208
    %v1210 = vld [vmem:[%s3] sm:$0xf]
    %v1211 = vld [vmem:[%s3 + $0x4] sm:$0xf]
    %v1212 = vld [vmem:[%s3 + $0x8] sm:$0xf]
    %v1213 = vld [vmem:[%s3 + $0xc] sm:$0xf]
    %v1214 = vld [vmem:[%s3 + $0x10] sm:$0xf]
    %v1215 = vld [vmem:[%s3 + $0x14] sm:$0xf]
    %v1216 = vld [vmem:[%s3 + $0x18] sm:$0xf]
    %v1217 = vld [vmem:[%s3 + $0x1c] sm:$0xf]
    %v1218 = vld [vmem:[%s3 + $0x20] sm:$0xf]
    %v1219 = vld [vmem:[%s3 + $0x24] sm:$0xf]
    %v1220 = vld [vmem:[%s3 + $0x28] sm:$0xf]
    %v1221 = vld [vmem:[%s3 + $0x2c] sm:$0xf]
    %v1222 = vld [vmem:[%s3 + $0x30] sm:$0xf]
    %v1223 = vld [vmem:[%s3 + $0x34] sm:$0xf]
    %v1224 = vld [vmem:[%s3 + $0x38] sm:$0xf]
    %v1225 = vld [vmem:[%s3 + $0x3c] sm:$0xf]
    %v1226 = vld [vmem:[%s4] sm:$0x1]
    %v1228 = vlaneseq
    %v1229 = vshrl.u32 %v1228, 7
    %v1230 = vsub.s32 0, %v1229
    %v1231 = vrot.slane %v1226, %v1230
    %v1249 = vunpack.c.l.b16 %v1210
    %v1250 = vunpack.c.l.b16 %v1211
    %v1251 = vunpack.c.l.b16 %v1212
    %v1252 = vunpack.c.l.b16 %v1213
    %v1253 = vunpack.c.l.b16 %v1214
    %v1254 = vunpack.c.l.b16 %v1215
    %v1255 = vunpack.c.l.b16 %v1216
    %v1256 = vunpack.c.l.b16 %v1217
    %v1257 = vunpack.c.l.b16 %v1218
    %v1258 = vunpack.c.l.b16 %v1219
    %v1259 = vunpack.c.l.b16 %v1220
    %v1260 = vunpack.c.l.b16 %v1221
    %v1261 = vunpack.c.l.b16 %v1222
    %v1262 = vunpack.c.l.b16 %v1223
    %v1263 = vunpack.c.l.b16 %v1224
    %v1264 = vunpack.c.l.b16 %v1225
    %v1265 = vpack.c.b16 %v1250, %v1249
    %v1266 = vpack.c.b16 %v1252, %v1251
    %v1267 = vpack.c.b16 %v1254, %v1253
    %v1268 = vpack.c.b16 %v1256, %v1255
    %v1269 = vpack.c.b16 %v1258, %v1257
    %v1270 = vpack.c.b16 %v1260, %v1259
    %v1271 = vpack.c.b16 %v1262, %v1261
    %v1272 = vpack.c.b16 %v1264, %v1263
    %1281 = vmatprep.subr.bf16.mxu0 0
    %1282 = vmatpush1.bf16.msra.mxu0 %v1265
    %1283 = vmatprep.subr.bf16.mxu0 0
    %1284 = vmatpush1.bf16.msra.mxu0 %v1266
    %1285 = vmatprep.subr.bf16.mxu0 0
    %1286 = vmatpush1.bf16.msra.mxu0 %v1267
    %1287 = vmatprep.subr.bf16.mxu0 0
    %1288 = vmatpush1.bf16.msra.mxu0 %v1268
    %1289 = vmatprep.subr.bf16.mxu0 0
    %1290 = vmatpush1.bf16.msra.mxu0 %v1269
    %1291 = vmatprep.subr.bf16.mxu0 0
    %1292 = vmatpush1.bf16.msra.mxu0 %v1270
    %1293 = vmatprep.subr.bf16.mxu0 0
    %1294 = vmatpush1.bf16.msra.mxu0 %v1271
    %1295 = vmatprep.subr.bf16.mxu0 0
    %1296 = vmatpush1.bf16.msra.mxu0 %v1272
    %1297 = vmatprep.subr.bf16.mxu0 0
    %1298 = vmatpush1.bf16.msra.mxu0 0
    %1299 = vmatprep.subr.bf16.mxu0 0
    %1300 = vmatpush1.bf16.msra.mxu0 0
    %1301 = vmatprep.subr.bf16.mxu0 0
    %1302 = vmatpush1.bf16.msra.mxu0 0
    %1303 = vmatprep.subr.bf16.mxu0 0
    %1304 = vmatpush1.bf16.msra.mxu0 0
    %1305 = vmatprep.subr.bf16.mxu0 0
    %1306 = vmatpush1.bf16.msra.mxu0 0
    %1307 = vmatprep.subr.bf16.mxu0 0
    %1308 = vmatpush1.bf16.msra.mxu0 0
    %1309 = vmatprep.subr.bf16.mxu0 0
    %1310 = vmatpush1.bf16.msra.mxu0 0
    %1311 = vmatprep.subr.bf16.mxu0 0
    %1312 = vmatpush1.bf16.msra.mxu0 0
    %1313 = vmatprep.mubr.bf16.mxu0 0
    %1314 = vmatmul.mubr.bf16.gmra.mrb[0].mxu0 %v1209
    %v1315 = vpop.f32.mrb[0].mxu0
    %v1316 = vadd.f32 %v1231, %v1315
    %v1317 = vpop.f32.mrb[0].mxu0
    %v1318 = vpop.f32.mrb[0].mxu0
    %v1319 = vpop.f32.mrb[0].mxu0
    %1320 = vdwg.mxu0
    %1321 = vst [vmem:[#allocation4] sm:$0x3] %v1316
    %v1322 = vlaneseq
    %v1323 = vand.u32 %v1322, 127
    %vm1324 = vcmp.lt.s32.totalorder %v1323, 10
    %v1325 = vsel %vm1324, %v1316, -1e+30
    %vm1326 = vcmask 1041408
    %v1327 = vsel %vm1326, %v1325, -inf
    %1328 = vmax.xlane.f32.xlu0 %v1327
    %v1329 = vpop.xlane.xlu0 %1328
    %v1330 = vsub.f32 %v1325, %v1329
    %v1331 = vmul.f32 %v1330, 1.442695
    %v1332 = vpow.pop %v1331
    %v1333 = vsel %vm1324, %v1332, 0.0
    %v1334 = vsel %vm1326, %v1333, 0.0
    %1335 = vadd.xlane.f32.xlu0 %v1334
    %v1336 = vpop.xlane.xlu0 %1335
    %v1337 = vrcp.pop %v1336
    %v1338 = vmul.f32 %v1333, %v1337
    %1339 = vst [vmem:[#allocation6] sm:$0x3] %v1338
    // Predicated region
    $region22: #{cnn_forward.5} parent=1 // pred_check
      _
    $region23: #{cnn_forward.5} parent=1 // pred_check_branch
      %1341 = sbr.rel (0) target = $region25
    $region24: #{cnn_forward.5} parent=1 // pred_region
      %s1343 = ssub.s32 32, 32
      %1344 = vsyncadd [#allocation3], %s1343
      %s1346 = sshll.u32 [#allocation2], 4
      %s1347 = int_to_ptr.vmem [resolvable:$true] %s1346
      %1349 = dma.vmem_to_hbm [thread:$0]  %s1347, 32, %s5, [#allocation3]
    $region25: #{cnn_forward.5} parent=1 // pred_fallthru
      _
    // Predicated region
    $region26: #{cnn_forward.5} parent=1 // pred_check
      _
    $region27: #{cnn_forward.5} parent=1 // pred_check_branch
      %1351 = sbr.rel (0) target = $region29
    $region28: #{cnn_forward.5} parent=1 // pred_region
      %s1353 = ssub.s32 32, 32
      %1354 = vsyncadd [#allocation5], %s1353
      %s1356 = sshll.u32 [#allocation4], 4
      %s1357 = int_to_ptr.vmem [resolvable:$true] %s1356
      %1359 = dma.vmem_to_hbm [thread:$0]  %s1357, 32, %s6, [#allocation5]
    $region29: #{cnn_forward.5} parent=1 // pred_fallthru
      _
    // Predicated region
    $region30: #{cnn_forward.5} parent=1 // pred_check
      _
    $region31: #{cnn_forward.5} parent=1 // pred_check_branch
      %1361 = sbr.rel (0) target = $region33
    $region32: #{cnn_forward.5} parent=1 // pred_region
      %s1363 = ssub.s32 32, 32
      %1364 = vsyncadd [#allocation5], %s1363
      %s1366 = sshll.u32 [#allocation6], 4
      %s1367 = int_to_ptr.vmem [resolvable:$true] %s1366
      %1369 = dma.vmem_to_hbm [thread:$0]  %s1367, 32, %s7, [#allocation5]
    $region33: #{cnn_forward.5} parent=1 // pred_fallthru
      _
    // Predicated region
    $region34: #{cnn_forward.5} parent=1 // pred_check
      _
    $region35: #{cnn_forward.5} parent=1 // pred_check_branch
      %1371 = sbr.rel (0) target = $region37
    $region36: #{cnn_forward.5} parent=1 // pred_region
      %1372 = dma.done [#allocation3], 32
    $region37: #{cnn_forward.5} parent=1 // pred_fallthru
      _
    // Predicated region
    $region38: #{cnn_forward.5} parent=1 // pred_check
      _
    $region39: #{cnn_forward.5} parent=1 // pred_check_branch
      %1374 = sbr.rel (0) target = $region41
    $region40: #{cnn_forward.5} parent=1 // pred_region
      %1375 = dma.done [#allocation5], 32
    $region41: #{cnn_forward.5} parent=1 // pred_fallthru
      _
    // Predicated region
    $region42: #{cnn_forward.5} parent=1 // pred_check
      _
    $region43: #{cnn_forward.5} parent=1 // pred_check_branch
      %1377 = sbr.rel (0) target = $region45
    $region44: #{cnn_forward.5} parent=1 // pred_region
      %1378 = dma.done [#allocation5], 32
    $region45: #{cnn_forward.5} parent=1 // pred_fallthru
      _
    %1379 = vsyncpa [#allocation3], 1
    %1380 = vsyncpa [#allocation5], 1

</llo_original>
